<compile_context>
chip_gen: v5e
topology: v5e:2x2
jax: 0.10.0
libtpu: 0.0.40
codegen_flags: <defaults>
</compile_context>

<pallas_src>
import jax
import jax.numpy as jnp
from jax.experimental import pallas as pl
from jax.experimental.pallas import tpu as pltpu

# ------------------------- configuration (small shapes) -------------------------
IMAGE_SIZE  = 16
PATCH_SIZE  = 8
CHANNELS    = 3
NUM_CLASSES = 10
DIM         = 32
DEPTH       = 2
HEADS       = 5            # == num_patches + 1, required by the torch .view/residual
DIM_HEAD    = 16
MLP_DIM     = 64

INNER       = HEADS * DIM_HEAD                    # 80
NUM_PATCHES = (IMAGE_SIZE // PATCH_SIZE) ** 2     # 4
SEQ         = NUM_PATCHES + 1                     # 5
PATCH_DIM   = CHANNELS * PATCH_SIZE * PATCH_SIZE  # 192
SCALE       = float(DIM_HEAD) ** -0.5
EPS         = 1e-5
QKV_W       = 3 * INNER                           # 240 fused q|k|v output lanes
NB          = HEADS * SEQ                         # 25 rows of the "big" chunk matrix
NEG_INF     = -1e30

assert SEQ == HEADS, "torch .view(-1, h, n, d) residual add requires seq_len == heads"

# big-matrix row offsets in the repack scratch
Q_OFF, K_OFF, V_OFF = 0, NB, 2 * NB

# ---- packed "misc" constant buffer row layout (width = PATCH_DIM lanes) ----
ROW_PE_G1     = 0
ROW_PE_B1     = 1
ROW_PE_B      = 2
ROW_PE_G2     = 3
ROW_PE_B2     = 4
ROW_HEAD_G    = 5
ROW_HEAD_B    = 6
ROW_HEAD_BIAS = 7
ROW_PREFIX    = 8                          # SEQ rows: cls+pos[0], pos[1:]
ROW_HEAD_W    = ROW_PREFIX + SEQ           # NUM_CLASSES rows: head_w^T
ROW_BIAS      = ROW_HEAD_W + NUM_CLASSES   # NB rows: additive attention mask
MISC_ROWS     = ROW_BIAS + NB              # 48

# ---- packed per-layer vector buffer row layout (width = MLP_DIM lanes) ----
LV_PRE_G, LV_PRE_B, LV_ATT_G, LV_ATT_B, LV_BO, LV_FF_G, LV_FF_B, LV_B2, LV_B1 = range(9)
LV_ROWS = 9


# ------------------------------- in-kernel helpers ------------------------------
def _ln(x, g, b):
    # nn.LayerNorm over the last axis: biased variance, eps=1e-5.
    mu  = jnp.mean(x, axis=-1, keepdims=True)
    var = jnp.mean(jnp.square(x - mu), axis=-1, keepdims=True)
    return (x - mu) * jax.lax.rsqrt(var + EPS) * g + b


def _gelu(x):
    # exact erf GELU (torch nn.GELU default)
    return 0.5 * x * (1.0 + jax.lax.erf(x * 0.7071067811865476))


# ------------------------------ the fused ViT kernel -----------------------------
def vit_kernel(patches_ref, pe_w_ref, misc_ref, vecs_ref, w_in_ref, w_out_ref,
               out_ref,
               qkv_scr, big_scr, ob_scr, cat_scr):
    # ---- patch embedding: LN(patch_dim) -> Linear -> LN(dim) ----
    # row 0 of the patch block is a zero placeholder for the cls position;
    # its embedding is discarded by the row-select below.
    patch_rows = patches_ref[0]                                      # (SEQ, PATCH_DIM)
    h = _ln(patch_rows,
            misc_ref[ROW_PE_G1:ROW_PE_G1 + 1, :],
            misc_ref[ROW_PE_B1:ROW_PE_B1 + 1, :])
    h = (jnp.dot(h, pe_w_ref[...], preferred_element_type=jnp.float32)
         + misc_ref[ROW_PE_B:ROW_PE_B + 1, 0:DIM])
    h = _ln(h,
            misc_ref[ROW_PE_G2:ROW_PE_G2 + 1, 0:DIM],
            misc_ref[ROW_PE_B2:ROW_PE_B2 + 1, 0:DIM])                # (SEQ, DIM)

    # ---- cls token + positional embedding, built register-resident ----
    # prefix row 0 = cls + pos[0]; prefix rows 1.. = pos[1..]; emb dropout p=0.
    prefix = misc_ref[ROW_PREFIX:ROW_PREFIX + SEQ, 0:DIM]            # (SEQ, DIM)
    row_id = jax.lax.broadcasted_iota(jnp.int32, (SEQ, DIM), 0)
    x = prefix + jnp.where(row_id == 0, 0.0, h)                      # (SEQ, DIM)

    # additive mask: 0 on same-token (chunk_i, chunk_j) blocks, -1e30 elsewhere
    attn_bias = misc_ref[ROW_BIAS:ROW_BIAS + NB, 0:NB]               # (25, 25)

    # ---- transformer layers (DEPTH static -> unrolled; stacked weights) ----
    for d in range(DEPTH):
        # PreNorm LN followed by Attention.norm LN (both present in torch model)
        xn = _ln(x,
                 vecs_ref[d, LV_PRE_G:LV_PRE_G + 1, 0:DIM],
                 vecs_ref[d, LV_PRE_B:LV_PRE_B + 1, 0:DIM])
        xn = _ln(xn,
                 vecs_ref[d, LV_ATT_G:LV_ATT_G + 1, 0:DIM],
                 vecs_ref[d, LV_ATT_B:LV_ATT_B + 1, 0:DIM])

        # fused q|k|v projection: ONE lane-dense MXU matmul -> (SEQ, 240)
        qkv_scr[...] = jnp.dot(xn, w_in_ref[d, :, 0:QKV_W],
                               preferred_element_type=jnp.float32)

        # repack lane chunks into the (chunk*token, DIM_HEAD) layout that makes
        # the torch `.view(-1, h, n, d)` chunk attention a plain 2-D matmul.
        for i in range(HEADS):
            c0 = i * DIM_HEAD
            big_scr[Q_OFF + i * SEQ:Q_OFF + (i + 1) * SEQ, :] = \
                qkv_scr[:, c0:c0 + DIM_HEAD]
            big_scr[K_OFF + i * SEQ:K_OFF + (i + 1) * SEQ, :] = \
                qkv_scr[:, INNER + c0:INNER + c0 + DIM_HEAD]
            big_scr[V_OFF + i * SEQ:V_OFF + (i + 1) * SEQ, :] = \
                qkv_scr[:, 2 * INNER + c0:2 * INNER + c0 + DIM_HEAD]

        q_big = big_scr[Q_OFF:Q_OFF + NB, :]                         # (25, 16)
        k_big = big_scr[K_OFF:K_OFF + NB, :]
        v_big = big_scr[V_OFF:V_OFF + NB, :]

        # scores on the MXU: (25,16) . (25,16)^T over DIM_HEAD, masked to the
        # same-token blocks, then an exact row softmax (parity with torch).
        s = jax.lax.dot_general(q_big, k_big, (((1,), (1,)), ((), ())),
                                preferred_element_type=jnp.float32) * SCALE + attn_bias
        m = jnp.max(s, axis=-1, keepdims=True)
        e = jnp.exp(s - m)
        p_w = e / jnp.sum(e, axis=-1, keepdims=True)                 # (25, 25)

        ob_scr[...] = jnp.dot(p_w, v_big,
                              preferred_element_type=jnp.float32)    # (25, 16)

        # (chunk*token, DIM_HEAD) -> (token, INNER): chunk i lands on lanes
        # [16i, 16(i+1)), exactly the torch view-back layout.
        for i in range(HEADS):
            cat_scr[:, i * DIM_HEAD:(i + 1) * DIM_HEAD] = \
                ob_scr[i * SEQ:(i + 1) * SEQ, :]

        # fused out_proj: ONE (5,80)@(80,32) matmul + bias + residual
        attn_out = (jnp.dot(cat_scr[...], w_out_ref[d, 0:INNER, :],
                            preferred_element_type=jnp.float32)
                    + vecs_ref[d, LV_BO:LV_BO + 1, 0:DIM])
        x = attn_out + x

        # PreNorm FFN: LN -> Linear -> GELU (exact) -> Linear -> residual
        f = _ln(x,
                vecs_ref[d, LV_FF_G:LV_FF_G + 1, 0:DIM],
                vecs_ref[d, LV_FF_B:LV_FF_B + 1, 0:DIM])
        f = (jnp.dot(f, w_in_ref[d, :, QKV_W:QKV_W + MLP_DIM],
                     preferred_element_type=jnp.float32)
             + vecs_ref[d, LV_B1:LV_B1 + 1, 0:MLP_DIM])
        f = _gelu(f)
        f = (jnp.dot(f, w_out_ref[d, INNER:INNER + MLP_DIM, :],
                     preferred_element_type=jnp.float32)
             + vecs_ref[d, LV_B2:LV_B2 + 1, 0:DIM])
        x = f + x

    # ---- mlp_head on the cls token (pool = 'cls') ----
    cls_tok = x[0:1, :]                                              # (1, DIM)
    z = _ln(cls_tok,
            misc_ref[ROW_HEAD_G:ROW_HEAD_G + 1, 0:DIM],
            misc_ref[ROW_HEAD_B:ROW_HEAD_B + 1, 0:DIM])
    head_wT = misc_ref[ROW_HEAD_W:ROW_HEAD_W + NUM_CLASSES, 0:DIM]   # (10, 32)
    logits = (jax.lax.dot_general(z, head_wT, (((1,), (1,)), ((), ())),
                                  preferred_element_type=jnp.float32)
              + misc_ref[ROW_HEAD_BIAS:ROW_HEAD_BIAS + 1, 0:NUM_CLASSES])
    out_ref[0] = logits                                              # (1, NUM_CLASSES)


# ------------------------------- pallas_call wrapper -----------------------------
def vit_forward(packed, img):
    B = img.shape[0]
    # Rearrange 'b c (h p1) (w p2) -> b (h w) (p1 p2 c)'   (plain-JAX input prep)
    hp = IMAGE_SIZE // PATCH_SIZE
    wp = IMAGE_SIZE // PATCH_SIZE
    x = img.reshape(B, CHANNELS, hp, PATCH_SIZE, wp, PATCH_SIZE)
    x = jnp.transpose(x, (0, 2, 4, 3, 5, 1))                         # b h w p1 p2 c
    patches = x.reshape(B, NUM_PATCHES, PATCH_DIM)
    # prepend a zero placeholder row for the cls position (discarded in-kernel)
    patches = jnp.concatenate(
        [jnp.zeros((B, 1, PATCH_DIM), jnp.float32), patches], axis=1)  # (B, SEQ, PATCH_DIM)

    def full(shape, nd):
        return pl.BlockSpec(shape, lambda b: (0,) * nd)

    in_specs = [
        pl.BlockSpec((1, SEQ, PATCH_DIM), lambda b: (b, 0, 0)),      # patches (per batch)
        full((PATCH_DIM, DIM), 2),                                   # pe_w
        full((MISC_ROWS, PATCH_DIM), 2),                             # misc constants
        full((DEPTH, LV_ROWS, MLP_DIM), 3),                          # per-layer vectors
        full((DEPTH, DIM, QKV_W + MLP_DIM), 3),                      # wq|wk|wv|w1
        full((DEPTH, INNER + MLP_DIM, DIM), 3),                      # wo|w2
    ]

    out = pl.pallas_call(
        vit_kernel,
        out_shape=jax.ShapeDtypeStruct((B, 1, NUM_CLASSES), jnp.float32),
        grid=(B,),
        in_specs=in_specs,
        out_specs=pl.BlockSpec((1, 1, NUM_CLASSES), lambda b: (b, 0, 0)),
        scratch_shapes=[
            pltpu.VMEM((SEQ, QKV_W), jnp.float32),        # fused qkv result
            pltpu.VMEM((3 * NB, DIM_HEAD), jnp.float32),  # Q|K|V big (chunk*token) layout
            pltpu.VMEM((NB, DIM_HEAD), jnp.float32),      # attention output, big layout
            pltpu.VMEM((SEQ, INNER), jnp.float32),        # attention output, token layout
        ],
        compiler_params=pltpu.CompilerParams(
            dimension_semantics=("parallel",),            # batch across v7x's 2 TCs
            vmem_limit_bytes=32 * 1024 * 1024,
        ),
    )(patches, packed['pe_w'], packed['misc'], packed['vecs'],
      packed['w_in'], packed['w_out'])
    return out[:, 0, :]                                              # (B, NUM_CLASSES)


# ------------------------------- parameters & packing ----------------------------
def init_params(key):
    keys = iter(jax.random.split(key, 32))

    def nrm(shape, scale=0.02):
        return (scale * jax.random.normal(next(keys), shape)).astype(jnp.float32)

    ones  = lambda s: jnp.ones(s, jnp.float32)
    zeros = lambda s: jnp.zeros(s, jnp.float32)

    return {
        # to_patch_embedding: LN(patch_dim), Linear(patch_dim, dim), LN(dim)
        'pe_g1': ones((PATCH_DIM,)), 'pe_b1': zeros((PATCH_DIM,)),
        'pe_w': nrm((PATCH_DIM, DIM)), 'pe_b': nrm((DIM,)),
        'pe_g2': ones((DIM,)), 'pe_b2': zeros((DIM,)),
        'cls': jax.random.normal(next(keys), (DIM,)).astype(jnp.float32),
        'pos': jax.random.normal(next(keys), (SEQ, DIM)).astype(jnp.float32),
        # per-layer weights stacked over DEPTH (torch Linear weights pre-transposed)
        'pre_g': ones((DEPTH, DIM)),  'pre_b': zeros((DEPTH, DIM)),   # PreNorm LN
        'attn_g': ones((DEPTH, DIM)), 'attn_b': zeros((DEPTH, DIM)),  # Attention.norm LN
        'wq': nrm((DEPTH, DIM, INNER)),
        'wk': nrm((DEPTH, DIM, INNER)),
        'wv': nrm((DEPTH, DIM, INNER)),
        'wo': nrm((DEPTH, INNER, DIM)), 'bo': nrm((DEPTH, DIM)),
        'ff_g': ones((DEPTH, DIM)), 'ff_b': zeros((DEPTH, DIM)),      # PreNorm LN (FFN)
        'w1': nrm((DEPTH, DIM, MLP_DIM)), 'b1': nrm((DEPTH, MLP_DIM)),
        'w2': nrm((DEPTH, MLP_DIM, DIM)), 'b2': nrm((DEPTH, DIM)),
        'head_g': ones((DIM,)), 'head_b': zeros((DIM,)),
        'head_w': nrm((DIM, NUM_CLASSES)), 'head_bias': nrm((NUM_CLASSES,)),
    }


def pack_params(p):
    """Consolidate the ~27 logical parameters into 5 kernel inputs (+patches)."""
    misc = jnp.zeros((MISC_ROWS, PATCH_DIM), jnp.float32)
    misc = misc.at[ROW_PE_G1, :].set(p['pe_g1'])
    misc = misc.at[ROW_PE_B1, :].set(p['pe_b1'])
    misc = misc.at[ROW_PE_B, :DIM].set(p['pe_b'])
    misc = misc.at[ROW_PE_G2, :DIM].set(p['pe_g2'])
    misc = misc.at[ROW_PE_B2, :DIM].set(p['pe_b2'])
    misc = misc.at[ROW_HEAD_G, :DIM].set(p['head_g'])
    misc = misc.at[ROW_HEAD_B, :DIM].set(p['head_b'])
    misc = misc.at[ROW_HEAD_BIAS, :NUM_CLASSES].set(p['head_bias'])
    prefix = p['pos'].at[0, :].add(p['cls'])                        # cls folded into pos[0]
    misc = misc.at[ROW_PREFIX:ROW_PREFIX + SEQ, :DIM].set(prefix)
    misc = misc.at[ROW_HEAD_W:ROW_HEAD_W + NUM_CLASSES, :DIM].set(p['head_w'].T)
    # additive attention mask for the (chunk*token) big-matrix scores:
    # row r = chunk*SEQ + token; valid iff token(r) == token(c).
    r = jnp.arange(NB)
    same_tok = (r[:, None] % SEQ) == (r[None, :] % SEQ)
    attn_bias = jnp.where(same_tok, 0.0, NEG_INF).astype(jnp.float32)
    misc = misc.at[ROW_BIAS:ROW_BIAS + NB, :NB].set(attn_bias)

    vecs = jnp.zeros((DEPTH, LV_ROWS, MLP_DIM), jnp.float32)
    vecs = vecs.at[:, LV_PRE_G, :DIM].set(p['pre_g'])
    vecs = vecs.at[:, LV_PRE_B, :DIM].set(p['pre_b'])
    vecs = vecs.at[:, LV_ATT_G, :DIM].set(p['attn_g'])
    vecs = vecs.at[:, LV_ATT_B, :DIM].set(p['attn_b'])
    vecs = vecs.at[:, LV_BO, :DIM].set(p['bo'])
    vecs = vecs.at[:, LV_FF_G, :DIM].set(p['ff_g'])
    vecs = vecs.at[:, LV_FF_B, :DIM].set(p['ff_b'])
    vecs = vecs.at[:, LV_B2, :DIM].set(p['b2'])
    vecs = vecs.at[:, LV_B1, :].set(p['b1'])

    # lane-dense fused matmul weights
    w_in = jnp.concatenate([p['wq'], p['wk'], p['wv'], p['w1']], axis=-1)   # (D, 32, 304)
    w_out = jnp.concatenate([p['wo'], p['w2']], axis=1)                     # (D, 144, 32)

    return {'pe_w': p['pe_w'], 'misc': misc, 'vecs': vecs,
            'w_in': w_in, 'w_out': w_out}


# -------------------------------------- main --------------------------------------
if __name__ == "__main__":
    key = jax.random.PRNGKey(0)
    k_img, k_par = jax.random.split(key)
    img = jax.random.normal(k_img, (2, CHANNELS, IMAGE_SIZE, IMAGE_SIZE), jnp.float32)
    params = init_params(k_par)
    packed = pack_params(params)

    fwd = jax.jit(vit_forward)
    logits = jax.block_until_ready(fwd(packed, img))
    assert logits.shape == (2, NUM_CLASSES)
    assert bool(jnp.all(jnp.isfinite(logits)))
    print("KERNEL_OK")
</pallas_src>

<mosaic_0001>
module attributes {stable_mosaic.version = 11 : i64} {
  func.func @vit_kernel(%arg0: i32, %arg1: memref<1x5x192xf32, #tpu.memory_space<vmem>>, %arg2: memref<192x32xf32, #tpu.memory_space<vmem>>, %arg3: memref<48x192xf32, #tpu.memory_space<vmem>>, %arg4: memref<2x9x64xf32, #tpu.memory_space<vmem>>, %arg5: memref<2x32x304xf32, #tpu.memory_space<vmem>>, %arg6: memref<2x144x32xf32, #tpu.memory_space<vmem>>, %arg7: memref<1x1x10xf32, #tpu.memory_space<vmem>>, %arg8: memref<5x240xf32, #tpu.memory_space<vmem>>, %arg9: memref<75x16xf32, #tpu.memory_space<vmem>>, %arg10: memref<25x16xf32, #tpu.memory_space<vmem>>, %arg11: memref<5x80xf32, #tpu.memory_space<vmem>>) attributes {dimension_semantics = [#tpu.dimension_semantics<parallel>], iteration_bounds = array<i64: 2>, scalar_prefetch = 0 : i64, scratch_operands = 4 : i64, tpu.core_type = #tpu.core_type<tc>, window_params = [{transform_indices = @transform_0, window_bounds = array<i64: 1, 5, 192>}, {pipeline_mode = #tpu.pipeline_mode<synchronous>, transform_indices = @transform_1, window_bounds = array<i64: 192, 32>}, {pipeline_mode = #tpu.pipeline_mode<synchronous>, transform_indices = @transform_2, window_bounds = array<i64: 48, 192>}, {pipeline_mode = #tpu.pipeline_mode<synchronous>, transform_indices = @transform_3, window_bounds = array<i64: 2, 9, 64>}, {pipeline_mode = #tpu.pipeline_mode<synchronous>, transform_indices = @transform_4, window_bounds = array<i64: 2, 32, 304>}, {pipeline_mode = #tpu.pipeline_mode<synchronous>, transform_indices = @transform_5, window_bounds = array<i64: 2, 144, 32>}, {transform_indices = @transform_6, window_bounds = array<i64: 1, 1, 10>}]} {
    %c0 = arith.constant 0 : index
    %c0_0 = arith.constant 0 : index
    %c0_1 = arith.constant 0 : index
    %0 = vector.load %arg1[%c0, %c0_0, %c0_1] : memref<1x5x192xf32, #tpu.memory_space<vmem>>, vector<1x5x192xf32>
    %1 = vector.shape_cast %0 : vector<1x5x192xf32> to vector<5x192xf32>
    %c0_2 = arith.constant 0 : index
    %c0_3 = arith.constant 0 : index
    %2 = vector.load %arg3[%c0_2, %c0_3] : memref<48x192xf32, #tpu.memory_space<vmem>>, vector<1x192xf32>
    %c1 = arith.constant 1 : index
    %c0_4 = arith.constant 0 : index
    %3 = vector.load %arg3[%c1, %c0_4] : memref<48x192xf32, #tpu.memory_space<vmem>>, vector<1x192xf32>
    %cst = arith.constant dense<0.000000e+00> : vector<5xf32>
    %4 = vector.multi_reduction <add>, %1, %cst [1] : vector<5x192xf32> to vector<5xf32>
    %5 = vector.shape_cast %4 : vector<5xf32> to vector<5x1xf32>
    %cst_5 = arith.constant 1.920000e+02 : f32
    %6 = vector.broadcast %cst_5 : f32 to vector<5x1xf32>
    %7 = arith.divf %5, %6 : vector<5x1xf32>
    %8 = vector.broadcast %7 : vector<5x1xf32> to vector<5x192xf32>
    %9 = arith.subf %1, %8 : vector<5x192xf32>
    %10 = arith.mulf %9, %9 : vector<5x192xf32>
    %cst_6 = arith.constant dense<0.000000e+00> : vector<5xf32>
    %11 = vector.multi_reduction <add>, %10, %cst_6 [1] : vector<5x192xf32> to vector<5xf32>
    %12 = vector.shape_cast %11 : vector<5xf32> to vector<5x1xf32>
    %cst_7 = arith.constant 1.920000e+02 : f32
    %13 = vector.broadcast %cst_7 : f32 to vector<5x1xf32>
    %14 = arith.divf %12, %13 : vector<5x1xf32>
    %15 = vector.broadcast %7 : vector<5x1xf32> to vector<5x192xf32>
    %16 = arith.subf %1, %15 : vector<5x192xf32>
    %cst_8 = arith.constant 9.99999974E-6 : f32
    %17 = vector.broadcast %cst_8 : f32 to vector<5x1xf32>
    %18 = arith.addf %14, %17 : vector<5x1xf32>
    %19 = math.rsqrt %18 : vector<5x1xf32>
    %20 = vector.broadcast %19 : vector<5x1xf32> to vector<5x192xf32>
    %21 = arith.mulf %16, %20 : vector<5x192xf32>
    %22 = vector.broadcast %2 : vector<1x192xf32> to vector<5x192xf32>
    %23 = arith.mulf %21, %22 : vector<5x192xf32>
    %24 = vector.broadcast %3 : vector<1x192xf32> to vector<5x192xf32>
    %25 = arith.addf %23, %24 : vector<5x192xf32>
    %c0_9 = arith.constant 0 : index
    %c0_10 = arith.constant 0 : index
    %26 = vector.load %arg2[%c0_9, %c0_10] : memref<192x32xf32, #tpu.memory_space<vmem>>, vector<192x32xf32>
    %cst_11 = arith.constant dense<0.000000e+00> : vector<5x32xf32>
    %27 = tpu.matmul %25, %26, %cst_11 {dimension_numbers = #tpu.dot_dimension_numbers<[1], [0], [0], [1], [0, 0, 1, 1], [], []>} : vector<5x192xf32>, vector<192x32xf32>, vector<5x32xf32> -> vector<5x32xf32>
    %c2 = arith.constant 2 : index
    %c0_12 = arith.constant 0 : index
    %28 = vector.load %arg3[%c2, %c0_12] : memref<48x192xf32, #tpu.memory_space<vmem>>, vector<1x32xf32>
    %29 = vector.broadcast %28 : vector<1x32xf32> to vector<5x32xf32>
    %30 = arith.addf %27, %29 : vector<5x32xf32>
    %c3 = arith.constant 3 : index
    %c0_13 = arith.constant 0 : index
    %31 = vector.load %arg3[%c3, %c0_13] : memref<48x192xf32, #tpu.memory_space<vmem>>, vector<1x32xf32>
    %c4 = arith.constant 4 : index
    %c0_14 = arith.constant 0 : index
    %32 = vector.load %arg3[%c4, %c0_14] : memref<48x192xf32, #tpu.memory_space<vmem>>, vector<1x32xf32>
    %cst_15 = arith.constant dense<0.000000e+00> : vector<5xf32>
    %33 = vector.multi_reduction <add>, %30, %cst_15 [1] : vector<5x32xf32> to vector<5xf32>
    %34 = vector.shape_cast %33 : vector<5xf32> to vector<5x1xf32>
    %cst_16 = arith.constant 3.200000e+01 : f32
    %35 = vector.broadcast %cst_16 : f32 to vector<5x1xf32>
    %36 = arith.divf %34, %35 : vector<5x1xf32>
    %37 = vector.broadcast %36 : vector<5x1xf32> to vector<5x32xf32>
    %38 = arith.subf %30, %37 : vector<5x32xf32>
    %39 = arith.mulf %38, %38 : vector<5x32xf32>
    %cst_17 = arith.constant dense<0.000000e+00> : vector<5xf32>
    %40 = vector.multi_reduction <add>, %39, %cst_17 [1] : vector<5x32xf32> to vector<5xf32>
    %41 = vector.shape_cast %40 : vector<5xf32> to vector<5x1xf32>
    %cst_18 = arith.constant 3.200000e+01 : f32
    %42 = vector.broadcast %cst_18 : f32 to vector<5x1xf32>
    %43 = arith.divf %41, %42 : vector<5x1xf32>
    %44 = vector.broadcast %36 : vector<5x1xf32> to vector<5x32xf32>
    %45 = arith.subf %30, %44 : vector<5x32xf32>
    %cst_19 = arith.constant 9.99999974E-6 : f32
    %46 = vector.broadcast %cst_19 : f32 to vector<5x1xf32>
    %47 = arith.addf %43, %46 : vector<5x1xf32>
    %48 = math.rsqrt %47 : vector<5x1xf32>
    %49 = vector.broadcast %48 : vector<5x1xf32> to vector<5x32xf32>
    %50 = arith.mulf %45, %49 : vector<5x32xf32>
    %51 = vector.broadcast %31 : vector<1x32xf32> to vector<5x32xf32>
    %52 = arith.mulf %50, %51 : vector<5x32xf32>
    %53 = vector.broadcast %32 : vector<1x32xf32> to vector<5x32xf32>
    %54 = arith.addf %52, %53 : vector<5x32xf32>
    %c8 = arith.constant 8 : index
    %c0_20 = arith.constant 0 : index
    %55 = vector.load %arg3[%c8, %c0_20] : memref<48x192xf32, #tpu.memory_space<vmem>>, vector<5x32xf32>
    %56 = tpu.iota {dimensions = array<i32: 0>} : vector<5x32xi32>
    %c0_i32 = arith.constant 0 : i32
    %57 = vector.broadcast %c0_i32 : i32 to vector<5x32xi32>
    %58 = arith.cmpi eq, %56, %57 : vector<5x32xi32>
    %cst_21 = arith.constant 0.000000e+00 : f32
    %59 = vector.broadcast %cst_21 : f32 to vector<5x32xf32>
    %60 = arith.select %58, %59, %54 : vector<5x32xi1>, vector<5x32xf32>
    %61 = arith.addf %55, %60 : vector<5x32xf32>
    %c23 = arith.constant 23 : index
    %c0_22 = arith.constant 0 : index
    %62 = vector.load %arg3[%c23, %c0_22] : memref<48x192xf32, #tpu.memory_space<vmem>>, vector<25x25xf32>
    %c0_23 = arith.constant 0 : index
    %c0_24 = arith.constant 0 : index
    %c0_25 = arith.constant 0 : index
    %63 = vector.load %arg4[%c0_23, %c0_24, %c0_25] : memref<2x9x64xf32, #tpu.memory_space<vmem>>, vector<1x1x32xf32>
    %64 = vector.shape_cast %63 : vector<1x1x32xf32> to vector<1x32xf32>
    %c0_26 = arith.constant 0 : index
    %c1_27 = arith.constant 1 : index
    %c0_28 = arith.constant 0 : index
    %65 = vector.load %arg4[%c0_26, %c1_27, %c0_28] : memref<2x9x64xf32, #tpu.memory_space<vmem>>, vector<1x1x32xf32>
    %66 = vector.shape_cast %65 : vector<1x1x32xf32> to vector<1x32xf32>
    %cst_29 = arith.constant dense<0.000000e+00> : vector<5xf32>
    %67 = vector.multi_reduction <add>, %61, %cst_29 [1] : vector<5x32xf32> to vector<5xf32>
    %68 = vector.shape_cast %67 : vector<5xf32> to vector<5x1xf32>
    %cst_30 = arith.constant 3.200000e+01 : f32
    %69 = vector.broadcast %cst_30 : f32 to vector<5x1xf32>
    %70 = arith.divf %68, %69 : vector<5x1xf32>
    %71 = vector.broadcast %70 : vector<5x1xf32> to vector<5x32xf32>
    %72 = arith.subf %61, %71 : vector<5x32xf32>
    %73 = arith.mulf %72, %72 : vector<5x32xf32>
    %cst_31 = arith.constant dense<0.000000e+00> : vector<5xf32>
    %74 = vector.multi_reduction <add>, %73, %cst_31 [1] : vector<5x32xf32> to vector<5xf32>
    %75 = vector.shape_cast %74 : vector<5xf32> to vector<5x1xf32>
    %cst_32 = arith.constant 3.200000e+01 : f32
    %76 = vector.broadcast %cst_32 : f32 to vector<5x1xf32>
    %77 = arith.divf %75, %76 : vector<5x1xf32>
    %78 = vector.broadcast %70 : vector<5x1xf32> to vector<5x32xf32>
    %79 = arith.subf %61, %78 : vector<5x32xf32>
    %cst_33 = arith.constant 9.99999974E-6 : f32
    %80 = vector.broadcast %cst_33 : f32 to vector<5x1xf32>
    %81 = arith.addf %77, %80 : vector<5x1xf32>
    %82 = math.rsqrt %81 : vector<5x1xf32>
    %83 = vector.broadcast %82 : vector<5x1xf32> to vector<5x32xf32>
    %84 = arith.mulf %79, %83 : vector<5x32xf32>
    %85 = vector.broadcast %64 : vector<1x32xf32> to vector<5x32xf32>
    %86 = arith.mulf %84, %85 : vector<5x32xf32>
    %87 = vector.broadcast %66 : vector<1x32xf32> to vector<5x32xf32>
    %88 = arith.addf %86, %87 : vector<5x32xf32>
    %c0_34 = arith.constant 0 : index
    %c2_35 = arith.constant 2 : index
    %c0_36 = arith.constant 0 : index
    %89 = vector.load %arg4[%c0_34, %c2_35, %c0_36] : memref<2x9x64xf32, #tpu.memory_space<vmem>>, vector<1x1x32xf32>
    %90 = vector.shape_cast %89 : vector<1x1x32xf32> to vector<1x32xf32>
    %c0_37 = arith.constant 0 : index
    %c3_38 = arith.constant 3 : index
    %c0_39 = arith.constant 0 : index
    %91 = vector.load %arg4[%c0_37, %c3_38, %c0_39] : memref<2x9x64xf32, #tpu.memory_space<vmem>>, vector<1x1x32xf32>
    %92 = vector.shape_cast %91 : vector<1x1x32xf32> to vector<1x32xf32>
    %cst_40 = arith.constant dense<0.000000e+00> : vector<5xf32>
    %93 = vector.multi_reduction <add>, %88, %cst_40 [1] : vector<5x32xf32> to vector<5xf32>
    %94 = vector.shape_cast %93 : vector<5xf32> to vector<5x1xf32>
    %cst_41 = arith.constant 3.200000e+01 : f32
    %95 = vector.broadcast %cst_41 : f32 to vector<5x1xf32>
    %96 = arith.divf %94, %95 : vector<5x1xf32>
    %97 = vector.broadcast %96 : vector<5x1xf32> to vector<5x32xf32>
    %98 = arith.subf %88, %97 : vector<5x32xf32>
    %99 = arith.mulf %98, %98 : vector<5x32xf32>
    %cst_42 = arith.constant dense<0.000000e+00> : vector<5xf32>
    %100 = vector.multi_reduction <add>, %99, %cst_42 [1] : vector<5x32xf32> to vector<5xf32>
    %101 = vector.shape_cast %100 : vector<5xf32> to vector<5x1xf32>
    %cst_43 = arith.constant 3.200000e+01 : f32
    %102 = vector.broadcast %cst_43 : f32 to vector<5x1xf32>
    %103 = arith.divf %101, %102 : vector<5x1xf32>
    %104 = vector.broadcast %96 : vector<5x1xf32> to vector<5x32xf32>
    %105 = arith.subf %88, %104 : vector<5x32xf32>
    %cst_44 = arith.constant 9.99999974E-6 : f32
    %106 = vector.broadcast %cst_44 : f32 to vector<5x1xf32>
    %107 = arith.addf %103, %106 : vector<5x1xf32>
    %108 = math.rsqrt %107 : vector<5x1xf32>
    %109 = vector.broadcast %108 : vector<5x1xf32> to vector<5x32xf32>
    %110 = arith.mulf %105, %109 : vector<5x32xf32>
    %111 = vector.broadcast %90 : vector<1x32xf32> to vector<5x32xf32>
    %112 = arith.mulf %110, %111 : vector<5x32xf32>
    %113 = vector.broadcast %92 : vector<1x32xf32> to vector<5x32xf32>
    %114 = arith.addf %112, %113 : vector<5x32xf32>
    %c0_45 = arith.constant 0 : index
    %c0_46 = arith.constant 0 : index
    %c0_47 = arith.constant 0 : index
    %115 = vector.load %arg5[%c0_45, %c0_46, %c0_47] : memref<2x32x304xf32, #tpu.memory_space<vmem>>, vector<1x32x240xf32>
    %116 = vector.shape_cast %115 : vector<1x32x240xf32> to vector<32x240xf32>
    %cst_48 = arith.constant dense<0.000000e+00> : vector<5x240xf32>
    %117 = tpu.matmul %114, %116, %cst_48 {dimension_numbers = #tpu.dot_dimension_numbers<[1], [0], [0], [1], [0, 0, 1, 1], [], []>} : vector<5x32xf32>, vector<32x240xf32>, vector<5x240xf32> -> vector<5x240xf32>
    %c0_49 = arith.constant 0 : index
    %c0_50 = arith.constant 0 : index
    %118 = vector.load %arg8[%c0_49, %c0_50] : memref<5x240xf32, #tpu.memory_space<vmem>>, vector<5x240xf32>
    tpu.vector_store %arg8[%c0_49, %c0_50], %117 {strides = array<i32>} : memref<5x240xf32, #tpu.memory_space<vmem>>, vector<5x240xf32>,
    %c0_51 = arith.constant 0 : index
    %c0_52 = arith.constant 0 : index
    %119 = vector.load %arg8[%c0_51, %c0_52] : memref<5x240xf32, #tpu.memory_space<vmem>>, vector<5x16xf32>
    %c0_53 = arith.constant 0 : index
    %c0_54 = arith.constant 0 : index
    %120 = vector.load %arg9[%c0_53, %c0_54] : memref<75x16xf32, #tpu.memory_space<vmem>>, vector<5x16xf32>
    tpu.vector_store %arg9[%c0_53, %c0_54], %119 {strides = array<i32>} : memref<75x16xf32, #tpu.memory_space<vmem>>, vector<5x16xf32>,
    %c0_55 = arith.constant 0 : index
    %c80 = arith.constant 80 : index
    %121 = vector.load %arg8[%c0_55, %c80] : memref<5x240xf32, #tpu.memory_space<vmem>>, vector<5x16xf32>
    %c25 = arith.constant 25 : index
    %c0_56 = arith.constant 0 : index
    %122 = vector.load %arg9[%c25, %c0_56] : memref<75x16xf32, #tpu.memory_space<vmem>>, vector<5x16xf32>
    tpu.vector_store %arg9[%c25, %c0_56], %121 {strides = array<i32>} : memref<75x16xf32, #tpu.memory_space<vmem>>, vector<5x16xf32>,
    %c0_57 = arith.constant 0 : index
    %c160 = arith.constant 160 : index
    %123 = vector.load %arg8[%c0_57, %c160] : memref<5x240xf32, #tpu.memory_space<vmem>>, vector<5x16xf32>
    %c50 = arith.constant 50 : index
    %c0_58 = arith.constant 0 : index
    %124 = vector.load %arg9[%c50, %c0_58] : memref<75x16xf32, #tpu.memory_space<vmem>>, vector<5x16xf32>
    tpu.vector_store %arg9[%c50, %c0_58], %123 {strides = array<i32>} : memref<75x16xf32, #tpu.memory_space<vmem>>, vector<5x16xf32>,
    %c0_59 = arith.constant 0 : index
    %c16 = arith.constant 16 : index
    %125 = vector.load %arg8[%c0_59, %c16] : memref<5x240xf32, #tpu.memory_space<vmem>>, vector<5x16xf32>
    %c5 = arith.constant 5 : index
    %c0_60 = arith.constant 0 : index
    %126 = vector.load %arg9[%c5, %c0_60] : memref<75x16xf32, #tpu.memory_space<vmem>>, vector<5x16xf32>
    tpu.vector_store %arg9[%c5, %c0_60], %125 {strides = array<i32>} : memref<75x16xf32, #tpu.memory_space<vmem>>, vector<5x16xf32>,
    %c0_61 = arith.constant 0 : index
    %c96 = arith.constant 96 : index
    %127 = vector.load %arg8[%c0_61, %c96] : memref<5x240xf32, #tpu.memory_space<vmem>>, vector<5x16xf32>
    %c30 = arith.constant 30 : index
    %c0_62 = arith.constant 0 : index
    %128 = vector.load %arg9[%c30, %c0_62] : memref<75x16xf32, #tpu.memory_space<vmem>>, vector<5x16xf32>
    tpu.vector_store %arg9[%c30, %c0_62], %127 {strides = array<i32>} : memref<75x16xf32, #tpu.memory_space<vmem>>, vector<5x16xf32>,
    %c0_63 = arith.constant 0 : index
    %c176 = arith.constant 176 : index
    %129 = vector.load %arg8[%c0_63, %c176] : memref<5x240xf32, #tpu.memory_space<vmem>>, vector<5x16xf32>
    %c55 = arith.constant 55 : index
    %c0_64 = arith.constant 0 : index
    %130 = vector.load %arg9[%c55, %c0_64] : memref<75x16xf32, #tpu.memory_space<vmem>>, vector<5x16xf32>
    tpu.vector_store %arg9[%c55, %c0_64], %129 {strides = array<i32>} : memref<75x16xf32, #tpu.memory_space<vmem>>, vector<5x16xf32>,
    %c0_65 = arith.constant 0 : index
    %c32 = arith.constant 32 : index
    %131 = vector.load %arg8[%c0_65, %c32] : memref<5x240xf32, #tpu.memory_space<vmem>>, vector<5x16xf32>
    %c10 = arith.constant 10 : index
    %c0_66 = arith.constant 0 : index
    %132 = vector.load %arg9[%c10, %c0_66] : memref<75x16xf32, #tpu.memory_space<vmem>>, vector<5x16xf32>
    tpu.vector_store %arg9[%c10, %c0_66], %131 {strides = array<i32>} : memref<75x16xf32, #tpu.memory_space<vmem>>, vector<5x16xf32>,
    %c0_67 = arith.constant 0 : index
    %c112 = arith.constant 112 : index
    %133 = vector.load %arg8[%c0_67, %c112] : memref<5x240xf32, #tpu.memory_space<vmem>>, vector<5x16xf32>
    %c35 = arith.constant 35 : index
    %c0_68 = arith.constant 0 : index
    %134 = vector.load %arg9[%c35, %c0_68] : memref<75x16xf32, #tpu.memory_space<vmem>>, vector<5x16xf32>
    tpu.vector_store %arg9[%c35, %c0_68], %133 {strides = array<i32>} : memref<75x16xf32, #tpu.memory_space<vmem>>, vector<5x16xf32>,
    %c0_69 = arith.constant 0 : index
    %c192 = arith.constant 192 : index
    %135 = vector.load %arg8[%c0_69, %c192] : memref<5x240xf32, #tpu.memory_space<vmem>>, vector<5x16xf32>
    %c60 = arith.constant 60 : index
    %c0_70 = arith.constant 0 : index
    %136 = vector.load %arg9[%c60, %c0_70] : memref<75x16xf32, #tpu.memory_space<vmem>>, vector<5x16xf32>
    tpu.vector_store %arg9[%c60, %c0_70], %135 {strides = array<i32>} : memref<75x16xf32, #tpu.memory_space<vmem>>, vector<5x16xf32>,
    %c0_71 = arith.constant 0 : index
    %c48 = arith.constant 48 : index
    %137 = vector.load %arg8[%c0_71, %c48] : memref<5x240xf32, #tpu.memory_space<vmem>>, vector<5x16xf32>
    %c15 = arith.constant 15 : index
    %c0_72 = arith.constant 0 : index
    %138 = vector.load %arg9[%c15, %c0_72] : memref<75x16xf32, #tpu.memory_space<vmem>>, vector<5x16xf32>
    tpu.vector_store %arg9[%c15, %c0_72], %137 {strides = array<i32>} : memref<75x16xf32, #tpu.memory_space<vmem>>, vector<5x16xf32>,
    %c0_73 = arith.constant 0 : index
    %c128 = arith.constant 128 : index
    %139 = vector.load %arg8[%c0_73, %c128] : memref<5x240xf32, #tpu.memory_space<vmem>>, vector<5x16xf32>
    %c40 = arith.constant 40 : index
    %c0_74 = arith.constant 0 : index
    %140 = vector.load %arg9[%c40, %c0_74] : memref<75x16xf32, #tpu.memory_space<vmem>>, vector<5x16xf32>
    tpu.vector_store %arg9[%c40, %c0_74], %139 {strides = array<i32>} : memref<75x16xf32, #tpu.memory_space<vmem>>, vector<5x16xf32>,
    %c0_75 = arith.constant 0 : index
    %c208 = arith.constant 208 : index
    %141 = vector.load %arg8[%c0_75, %c208] : memref<5x240xf32, #tpu.memory_space<vmem>>, vector<5x16xf32>
    %c65 = arith.constant 65 : index
    %c0_76 = arith.constant 0 : index
    %142 = vector.load %arg9[%c65, %c0_76] : memref<75x16xf32, #tpu.memory_space<vmem>>, vector<5x16xf32>
    tpu.vector_store %arg9[%c65, %c0_76], %141 {strides = array<i32>} : memref<75x16xf32, #tpu.memory_space<vmem>>, vector<5x16xf32>,
    %c0_77 = arith.constant 0 : index
    %c64 = arith.constant 64 : index
    %143 = vector.load %arg8[%c0_77, %c64] : memref<5x240xf32, #tpu.memory_space<vmem>>, vector<5x16xf32>
    %c20 = arith.constant 20 : index
    %c0_78 = arith.constant 0 : index
    %144 = vector.load %arg9[%c20, %c0_78] : memref<75x16xf32, #tpu.memory_space<vmem>>, vector<5x16xf32>
    tpu.vector_store %arg9[%c20, %c0_78], %143 {strides = array<i32>} : memref<75x16xf32, #tpu.memory_space<vmem>>, vector<5x16xf32>,
    %c0_79 = arith.constant 0 : index
    %c144 = arith.constant 144 : index
    %145 = vector.load %arg8[%c0_79, %c144] : memref<5x240xf32, #tpu.memory_space<vmem>>, vector<5x16xf32>
    %c45 = arith.constant 45 : index
    %c0_80 = arith.constant 0 : index
    %146 = vector.load %arg9[%c45, %c0_80] : memref<75x16xf32, #tpu.memory_space<vmem>>, vector<5x16xf32>
    tpu.vector_store %arg9[%c45, %c0_80], %145 {strides = array<i32>} : memref<75x16xf32, #tpu.memory_space<vmem>>, vector<5x16xf32>,
    %c0_81 = arith.constant 0 : index
    %c224 = arith.constant 224 : index
    %147 = vector.load %arg8[%c0_81, %c224] : memref<5x240xf32, #tpu.memory_space<vmem>>, vector<5x16xf32>
    %c70 = arith.constant 70 : index
    %c0_82 = arith.constant 0 : index
    %148 = vector.load %arg9[%c70, %c0_82] : memref<75x16xf32, #tpu.memory_space<vmem>>, vector<5x16xf32>
    tpu.vector_store %arg9[%c70, %c0_82], %147 {strides = array<i32>} : memref<75x16xf32, #tpu.memory_space<vmem>>, vector<5x16xf32>,
    %c0_83 = arith.constant 0 : index
    %c0_84 = arith.constant 0 : index
    %149 = vector.load %arg9[%c0_83, %c0_84] : memref<75x16xf32, #tpu.memory_space<vmem>>, vector<25x16xf32>
    %c25_85 = arith.constant 25 : index
    %c0_86 = arith.constant 0 : index
    %150 = vector.load %arg9[%c25_85, %c0_86] : memref<75x16xf32, #tpu.memory_space<vmem>>, vector<25x16xf32>
    %c50_87 = arith.constant 50 : index
    %c0_88 = arith.constant 0 : index
    %151 = vector.load %arg9[%c50_87, %c0_88] : memref<75x16xf32, #tpu.memory_space<vmem>>, vector<25x16xf32>
    %cst_89 = arith.constant dense<0.000000e+00> : vector<25x25xf32>
    %152 = tpu.matmul %149, %150, %cst_89 {dimension_numbers = #tpu.dot_dimension_numbers<[1], [1], [0], [0], [0, 0, 1, 0], [], []>} : vector<25x16xf32>, vector<25x16xf32>, vector<25x25xf32> -> vector<25x25xf32>
    %cst_90 = arith.constant 2.500000e-01 : f32
    %153 = vector.broadcast %cst_90 : f32 to vector<25x25xf32>
    %154 = arith.mulf %152, %153 : vector<25x25xf32>
    %155 = arith.addf %154, %62 : vector<25x25xf32>
    %cst_91 = arith.constant dense<0xFF800000> : vector<25xf32>
    %156 = vector.multi_reduction <maximumf>, %155, %cst_91 [1] : vector<25x25xf32> to vector<25xf32>
    %157 = vector.shape_cast %156 : vector<25xf32> to vector<25x1xf32>
    %158 = vector.broadcast %157 : vector<25x1xf32> to vector<25x25xf32>
    %159 = arith.subf %155, %158 : vector<25x25xf32>
    %160 = math.exp %159 : vector<25x25xf32>
    %cst_92 = arith.constant dense<0.000000e+00> : vector<25xf32>
    %161 = vector.multi_reduction <add>, %160, %cst_92 [1] : vector<25x25xf32> to vector<25xf32>
    %162 = vector.shape_cast %161 : vector<25xf32> to vector<25x1xf32>
    %163 = vector.broadcast %162 : vector<25x1xf32> to vector<25x25xf32>
    %164 = arith.divf %160, %163 : vector<25x25xf32>
    %cst_93 = arith.constant dense<0.000000e+00> : vector<25x16xf32>
    %165 = tpu.matmul %164, %151, %cst_93 {dimension_numbers = #tpu.dot_dimension_numbers<[1], [0], [0], [1], [0, 0, 1, 1], [], []>} : vector<25x25xf32>, vector<25x16xf32>, vector<25x16xf32> -> vector<25x16xf32>
    %c0_94 = arith.constant 0 : index
    %c0_95 = arith.constant 0 : index
    %166 = vector.load %arg10[%c0_94, %c0_95] : memref<25x16xf32, #tpu.memory_space<vmem>>, vector<25x16xf32>
    tpu.vector_store %arg10[%c0_94, %c0_95], %165 {strides = array<i32>} : memref<25x16xf32, #tpu.memory_space<vmem>>, vector<25x16xf32>,
    %c0_96 = arith.constant 0 : index
    %c0_97 = arith.constant 0 : index
    %167 = vector.load %arg10[%c0_96, %c0_97] : memref<25x16xf32, #tpu.memory_space<vmem>>, vector<5x16xf32>
    %c0_98 = arith.constant 0 : index
    %c0_99 = arith.constant 0 : index
    %168 = vector.load %arg11[%c0_98, %c0_99] : memref<5x80xf32, #tpu.memory_space<vmem>>, vector<5x16xf32>
    tpu.vector_store %arg11[%c0_98, %c0_99], %167 {strides = array<i32>} : memref<5x80xf32, #tpu.memory_space<vmem>>, vector<5x16xf32>,
    %c5_100 = arith.constant 5 : index
    %c0_101 = arith.constant 0 : index
    %169 = vector.load %arg10[%c5_100, %c0_101] : memref<25x16xf32, #tpu.memory_space<vmem>>, vector<5x16xf32>
    %c0_102 = arith.constant 0 : index
    %c16_103 = arith.constant 16 : index
    %170 = vector.load %arg11[%c0_102, %c16_103] : memref<5x80xf32, #tpu.memory_space<vmem>>, vector<5x16xf32>
    tpu.vector_store %arg11[%c0_102, %c16_103], %169 {strides = array<i32>} : memref<5x80xf32, #tpu.memory_space<vmem>>, vector<5x16xf32>,
    %c10_104 = arith.constant 10 : index
    %c0_105 = arith.constant 0 : index
    %171 = vector.load %arg10[%c10_104, %c0_105] : memref<25x16xf32, #tpu.memory_space<vmem>>, vector<5x16xf32>
    %c0_106 = arith.constant 0 : index
    %c32_107 = arith.constant 32 : index
    %172 = vector.load %arg11[%c0_106, %c32_107] : memref<5x80xf32, #tpu.memory_space<vmem>>, vector<5x16xf32>
    tpu.vector_store %arg11[%c0_106, %c32_107], %171 {strides = array<i32>} : memref<5x80xf32, #tpu.memory_space<vmem>>, vector<5x16xf32>,
    %c15_108 = arith.constant 15 : index
    %c0_109 = arith.constant 0 : index
    %173 = vector.load %arg10[%c15_108, %c0_109] : memref<25x16xf32, #tpu.memory_space<vmem>>, vector<5x16xf32>
    %c0_110 = arith.constant 0 : index
    %c48_111 = arith.constant 48 : index
    %174 = vector.load %arg11[%c0_110, %c48_111] : memref<5x80xf32, #tpu.memory_space<vmem>>, vector<5x16xf32>
    tpu.vector_store %arg11[%c0_110, %c48_111], %173 {strides = array<i32>} : memref<5x80xf32, #tpu.memory_space<vmem>>, vector<5x16xf32>,
    %c20_112 = arith.constant 20 : index
    %c0_113 = arith.constant 0 : index
    %175 = vector.load %arg10[%c20_112, %c0_113] : memref<25x16xf32, #tpu.memory_space<vmem>>, vector<5x16xf32>
    %c0_114 = arith.constant 0 : index
    %c64_115 = arith.constant 64 : index
    %176 = vector.load %arg11[%c0_114, %c64_115] : memref<5x80xf32, #tpu.memory_space<vmem>>, vector<5x16xf32>
    tpu.vector_store %arg11[%c0_114, %c64_115], %175 {strides = array<i32>} : memref<5x80xf32, #tpu.memory_space<vmem>>, vector<5x16xf32>,
    %c0_116 = arith.constant 0 : index
    %c0_117 = arith.constant 0 : index
    %177 = vector.load %arg11[%c0_116, %c0_117] : memref<5x80xf32, #tpu.memory_space<vmem>>, vector<5x80xf32>
    %c0_118 = arith.constant 0 : index
    %c0_119 = arith.constant 0 : index
    %c0_120 = arith.constant 0 : index
    %178 = vector.load %arg6[%c0_118, %c0_119, %c0_120] : memref<2x144x32xf32, #tpu.memory_space<vmem>>, vector<1x80x32xf32>
    %179 = vector.shape_cast %178 : vector<1x80x32xf32> to vector<80x32xf32>
    %cst_121 = arith.constant dense<0.000000e+00> : vector<5x32xf32>
    %180 = tpu.matmul %177, %179, %cst_121 {dimension_numbers = #tpu.dot_dimension_numbers<[1], [0], [0], [1], [0, 0, 1, 1], [], []>} : vector<5x80xf32>, vector<80x32xf32>, vector<5x32xf32> -> vector<5x32xf32>
    %c0_122 = arith.constant 0 : index
    %c4_123 = arith.constant 4 : index
    %c0_124 = arith.constant 0 : index
    %181 = vector.load %arg4[%c0_122, %c4_123, %c0_124] : memref<2x9x64xf32, #tpu.memory_space<vmem>>, vector<1x1x32xf32>
    %182 = vector.shape_cast %181 : vector<1x1x32xf32> to vector<1x32xf32>
    %183 = vector.broadcast %182 : vector<1x32xf32> to vector<5x32xf32>
    %184 = arith.addf %180, %183 : vector<5x32xf32>
    %185 = arith.addf %184, %61 : vector<5x32xf32>
    %c0_125 = arith.constant 0 : index
    %c5_126 = arith.constant 5 : index
    %c0_127 = arith.constant 0 : index
    %186 = vector.load %arg4[%c0_125, %c5_126, %c0_127] : memref<2x9x64xf32, #tpu.memory_space<vmem>>, vector<1x1x32xf32>
    %187 = vector.shape_cast %186 : vector<1x1x32xf32> to vector<1x32xf32>
    %c0_128 = arith.constant 0 : index
    %c6 = arith.constant 6 : index
    %c0_129 = arith.constant 0 : index
    %188 = vector.load %arg4[%c0_128, %c6, %c0_129] : memref<2x9x64xf32, #tpu.memory_space<vmem>>, vector<1x1x32xf32>
    %189 = vector.shape_cast %188 : vector<1x1x32xf32> to vector<1x32xf32>
    %cst_130 = arith.constant dense<0.000000e+00> : vector<5xf32>
    %190 = vector.multi_reduction <add>, %185, %cst_130 [1] : vector<5x32xf32> to vector<5xf32>
    %191 = vector.shape_cast %190 : vector<5xf32> to vector<5x1xf32>
    %cst_131 = arith.constant 3.200000e+01 : f32
    %192 = vector.broadcast %cst_131 : f32 to vector<5x1xf32>
    %193 = arith.divf %191, %192 : vector<5x1xf32>
    %194 = vector.broadcast %193 : vector<5x1xf32> to vector<5x32xf32>
    %195 = arith.subf %185, %194 : vector<5x32xf32>
    %196 = arith.mulf %195, %195 : vector<5x32xf32>
    %cst_132 = arith.constant dense<0.000000e+00> : vector<5xf32>
    %197 = vector.multi_reduction <add>, %196, %cst_132 [1] : vector<5x32xf32> to vector<5xf32>
    %198 = vector.shape_cast %197 : vector<5xf32> to vector<5x1xf32>
    %cst_133 = arith.constant 3.200000e+01 : f32
    %199 = vector.broadcast %cst_133 : f32 to vector<5x1xf32>
    %200 = arith.divf %198, %199 : vector<5x1xf32>
    %201 = vector.broadcast %193 : vector<5x1xf32> to vector<5x32xf32>
    %202 = arith.subf %185, %201 : vector<5x32xf32>
    %cst_134 = arith.constant 9.99999974E-6 : f32
    %203 = vector.broadcast %cst_134 : f32 to vector<5x1xf32>
    %204 = arith.addf %200, %203 : vector<5x1xf32>
    %205 = math.rsqrt %204 : vector<5x1xf32>
    %206 = vector.broadcast %205 : vector<5x1xf32> to vector<5x32xf32>
    %207 = arith.mulf %202, %206 : vector<5x32xf32>
    %208 = vector.broadcast %187 : vector<1x32xf32> to vector<5x32xf32>
    %209 = arith.mulf %207, %208 : vector<5x32xf32>
    %210 = vector.broadcast %189 : vector<1x32xf32> to vector<5x32xf32>
    %211 = arith.addf %209, %210 : vector<5x32xf32>
    %c0_135 = arith.constant 0 : index
    %c0_136 = arith.constant 0 : index
    %c240 = arith.constant 240 : index
    %212 = vector.load %arg5[%c0_135, %c0_136, %c240] : memref<2x32x304xf32, #tpu.memory_space<vmem>>, vector<1x32x64xf32>
    %213 = vector.shape_cast %212 : vector<1x32x64xf32> to vector<32x64xf32>
    %cst_137 = arith.constant dense<0.000000e+00> : vector<5x64xf32>
    %214 = tpu.matmul %211, %213, %cst_137 {dimension_numbers = #tpu.dot_dimension_numbers<[1], [0], [0], [1], [0, 0, 1, 1], [], []>} : vector<5x32xf32>, vector<32x64xf32>, vector<5x64xf32> -> vector<5x64xf32>
    %c0_138 = arith.constant 0 : index
    %c8_139 = arith.constant 8 : index
    %c0_140 = arith.constant 0 : index
    %215 = vector.load %arg4[%c0_138, %c8_139, %c0_140] : memref<2x9x64xf32, #tpu.memory_space<vmem>>, vector<1x1x64xf32>
    %216 = vector.shape_cast %215 : vector<1x1x64xf32> to vector<1x64xf32>
    %217 = vector.broadcast %216 : vector<1x64xf32> to vector<5x64xf32>
    %218 = arith.addf %214, %217 : vector<5x64xf32>
    %cst_141 = arith.constant 5.000000e-01 : f32
    %219 = vector.broadcast %cst_141 : f32 to vector<5x64xf32>
    %220 = arith.mulf %219, %218 : vector<5x64xf32>
    %cst_142 = arith.constant 0.707106769 : f32
    %221 = vector.broadcast %cst_142 : f32 to vector<5x64xf32>
    %222 = arith.mulf %218, %221 : vector<5x64xf32>
    %223 = math.erf %222 : vector<5x64xf32>
    %cst_143 = arith.constant 1.000000e+00 : f32
    %224 = vector.broadcast %cst_143 : f32 to vector<5x64xf32>
    %225 = arith.addf %224, %223 : vector<5x64xf32>
    %226 = arith.mulf %220, %225 : vector<5x64xf32>
    %c0_144 = arith.constant 0 : index
    %c80_145 = arith.constant 80 : index
    %c0_146 = arith.constant 0 : index
    %227 = vector.load %arg6[%c0_144, %c80_145, %c0_146] : memref<2x144x32xf32, #tpu.memory_space<vmem>>, vector<1x64x32xf32>
    %228 = vector.shape_cast %227 : vector<1x64x32xf32> to vector<64x32xf32>
    %cst_147 = arith.constant dense<0.000000e+00> : vector<5x32xf32>
    %229 = tpu.matmul %226, %228, %cst_147 {dimension_numbers = #tpu.dot_dimension_numbers<[1], [0], [0], [1], [0, 0, 1, 1], [], []>} : vector<5x64xf32>, vector<64x32xf32>, vector<5x32xf32> -> vector<5x32xf32>
    %c0_148 = arith.constant 0 : index
    %c7 = arith.constant 7 : index
    %c0_149 = arith.constant 0 : index
    %230 = vector.load %arg4[%c0_148, %c7, %c0_149] : memref<2x9x64xf32, #tpu.memory_space<vmem>>, vector<1x1x32xf32>
    %231 = vector.shape_cast %230 : vector<1x1x32xf32> to vector<1x32xf32>
    %232 = vector.broadcast %231 : vector<1x32xf32> to vector<5x32xf32>
    %233 = arith.addf %229, %232 : vector<5x32xf32>
    %234 = arith.addf %233, %185 : vector<5x32xf32>
    %c1_150 = arith.constant 1 : index
    %c0_151 = arith.constant 0 : index
    %c0_152 = arith.constant 0 : index
    %235 = vector.load %arg4[%c1_150, %c0_151, %c0_152] : memref<2x9x64xf32, #tpu.memory_space<vmem>>, vector<1x1x32xf32>
    %236 = vector.shape_cast %235 : vector<1x1x32xf32> to vector<1x32xf32>
    %c1_153 = arith.constant 1 : index
    %c1_154 = arith.constant 1 : index
    %c0_155 = arith.constant 0 : index
    %237 = vector.load %arg4[%c1_153, %c1_154, %c0_155] : memref<2x9x64xf32, #tpu.memory_space<vmem>>, vector<1x1x32xf32>
    %238 = vector.shape_cast %237 : vector<1x1x32xf32> to vector<1x32xf32>
    %cst_156 = arith.constant dense<0.000000e+00> : vector<5xf32>
    %239 = vector.multi_reduction <add>, %234, %cst_156 [1] : vector<5x32xf32> to vector<5xf32>
    %240 = vector.shape_cast %239 : vector<5xf32> to vector<5x1xf32>
    %cst_157 = arith.constant 3.200000e+01 : f32
    %241 = vector.broadcast %cst_157 : f32 to vector<5x1xf32>
    %242 = arith.divf %240, %241 : vector<5x1xf32>
    %243 = vector.broadcast %242 : vector<5x1xf32> to vector<5x32xf32>
    %244 = arith.subf %234, %243 : vector<5x32xf32>
    %245 = arith.mulf %244, %244 : vector<5x32xf32>
    %cst_158 = arith.constant dense<0.000000e+00> : vector<5xf32>
    %246 = vector.multi_reduction <add>, %245, %cst_158 [1] : vector<5x32xf32> to vector<5xf32>
    %247 = vector.shape_cast %246 : vector<5xf32> to vector<5x1xf32>
    %cst_159 = arith.constant 3.200000e+01 : f32
    %248 = vector.broadcast %cst_159 : f32 to vector<5x1xf32>
    %249 = arith.divf %247, %248 : vector<5x1xf32>
    %250 = vector.broadcast %242 : vector<5x1xf32> to vector<5x32xf32>
    %251 = arith.subf %234, %250 : vector<5x32xf32>
    %cst_160 = arith.constant 9.99999974E-6 : f32
    %252 = vector.broadcast %cst_160 : f32 to vector<5x1xf32>
    %253 = arith.addf %249, %252 : vector<5x1xf32>
    %254 = math.rsqrt %253 : vector<5x1xf32>
    %255 = vector.broadcast %254 : vector<5x1xf32> to vector<5x32xf32>
    %256 = arith.mulf %251, %255 : vector<5x32xf32>
    %257 = vector.broadcast %236 : vector<1x32xf32> to vector<5x32xf32>
    %258 = arith.mulf %256, %257 : vector<5x32xf32>
    %259 = vector.broadcast %238 : vector<1x32xf32> to vector<5x32xf32>
    %260 = arith.addf %258, %259 : vector<5x32xf32>
    %c1_161 = arith.constant 1 : index
    %c2_162 = arith.constant 2 : index
    %c0_163 = arith.constant 0 : index
    %261 = vector.load %arg4[%c1_161, %c2_162, %c0_163] : memref<2x9x64xf32, #tpu.memory_space<vmem>>, vector<1x1x32xf32>
    %262 = vector.shape_cast %261 : vector<1x1x32xf32> to vector<1x32xf32>
    %c1_164 = arith.constant 1 : index
    %c3_165 = arith.constant 3 : index
    %c0_166 = arith.constant 0 : index
    %263 = vector.load %arg4[%c1_164, %c3_165, %c0_166] : memref<2x9x64xf32, #tpu.memory_space<vmem>>, vector<1x1x32xf32>
    %264 = vector.shape_cast %263 : vector<1x1x32xf32> to vector<1x32xf32>
    %cst_167 = arith.constant dense<0.000000e+00> : vector<5xf32>
    %265 = vector.multi_reduction <add>, %260, %cst_167 [1] : vector<5x32xf32> to vector<5xf32>
    %266 = vector.shape_cast %265 : vector<5xf32> to vector<5x1xf32>
    %cst_168 = arith.constant 3.200000e+01 : f32
    %267 = vector.broadcast %cst_168 : f32 to vector<5x1xf32>
    %268 = arith.divf %266, %267 : vector<5x1xf32>
    %269 = vector.broadcast %268 : vector<5x1xf32> to vector<5x32xf32>
    %270 = arith.subf %260, %269 : vector<5x32xf32>
    %271 = arith.mulf %270, %270 : vector<5x32xf32>
    %cst_169 = arith.constant dense<0.000000e+00> : vector<5xf32>
    %272 = vector.multi_reduction <add>, %271, %cst_169 [1] : vector<5x32xf32> to vector<5xf32>
    %273 = vector.shape_cast %272 : vector<5xf32> to vector<5x1xf32>
    %cst_170 = arith.constant 3.200000e+01 : f32
    %274 = vector.broadcast %cst_170 : f32 to vector<5x1xf32>
    %275 = arith.divf %273, %274 : vector<5x1xf32>
    %276 = vector.broadcast %268 : vector<5x1xf32> to vector<5x32xf32>
    %277 = arith.subf %260, %276 : vector<5x32xf32>
    %cst_171 = arith.constant 9.99999974E-6 : f32
    %278 = vector.broadcast %cst_171 : f32 to vector<5x1xf32>
    %279 = arith.addf %275, %278 : vector<5x1xf32>
    %280 = math.rsqrt %279 : vector<5x1xf32>
    %281 = vector.broadcast %280 : vector<5x1xf32> to vector<5x32xf32>
    %282 = arith.mulf %277, %281 : vector<5x32xf32>
    %283 = vector.broadcast %262 : vector<1x32xf32> to vector<5x32xf32>
    %284 = arith.mulf %282, %283 : vector<5x32xf32>
    %285 = vector.broadcast %264 : vector<1x32xf32> to vector<5x32xf32>
    %286 = arith.addf %284, %285 : vector<5x32xf32>
    %c1_172 = arith.constant 1 : index
    %c0_173 = arith.constant 0 : index
    %c0_174 = arith.constant 0 : index
    %287 = vector.load %arg5[%c1_172, %c0_173, %c0_174] : memref<2x32x304xf32, #tpu.memory_space<vmem>>, vector<1x32x240xf32>
    %288 = vector.shape_cast %287 : vector<1x32x240xf32> to vector<32x240xf32>
    %cst_175 = arith.constant dense<0.000000e+00> : vector<5x240xf32>
    %289 = tpu.matmul %286, %288, %cst_175 {dimension_numbers = #tpu.dot_dimension_numbers<[1], [0], [0], [1], [0, 0, 1, 1], [], []>} : vector<5x32xf32>, vector<32x240xf32>, vector<5x240xf32> -> vector<5x240xf32>
    %c0_176 = arith.constant 0 : index
    %c0_177 = arith.constant 0 : index
    %290 = vector.load %arg8[%c0_176, %c0_177] : memref<5x240xf32, #tpu.memory_space<vmem>>, vector<5x240xf32>
    tpu.vector_store %arg8[%c0_176, %c0_177], %289 {strides = array<i32>} : memref<5x240xf32, #tpu.memory_space<vmem>>, vector<5x240xf32>,
    %c0_178 = arith.constant 0 : index
    %c0_179 = arith.constant 0 : index
    %291 = vector.load %arg8[%c0_178, %c0_179] : memref<5x240xf32, #tpu.memory_space<vmem>>, vector<5x16xf32>
    %c0_180 = arith.constant 0 : index
    %c0_181 = arith.constant 0 : index
    %292 = vector.load %arg9[%c0_180, %c0_181] : memref<75x16xf32, #tpu.memory_space<vmem>>, vector<5x16xf32>
    tpu.vector_store %arg9[%c0_180, %c0_181], %291 {strides = array<i32>} : memref<75x16xf32, #tpu.memory_space<vmem>>, vector<5x16xf32>,
    %c0_182 = arith.constant 0 : index
    %c80_183 = arith.constant 80 : index
    %293 = vector.load %arg8[%c0_182, %c80_183] : memref<5x240xf32, #tpu.memory_space<vmem>>, vector<5x16xf32>
    %c25_184 = arith.constant 25 : index
    %c0_185 = arith.constant 0 : index
    %294 = vector.load %arg9[%c25_184, %c0_185] : memref<75x16xf32, #tpu.memory_space<vmem>>, vector<5x16xf32>
    tpu.vector_store %arg9[%c25_184, %c0_185], %293 {strides = array<i32>} : memref<75x16xf32, #tpu.memory_space<vmem>>, vector<5x16xf32>,
    %c0_186 = arith.constant 0 : index
    %c160_187 = arith.constant 160 : index
    %295 = vector.load %arg8[%c0_186, %c160_187] : memref<5x240xf32, #tpu.memory_space<vmem>>, vector<5x16xf32>
    %c50_188 = arith.constant 50 : index
    %c0_189 = arith.constant 0 : index
    %296 = vector.load %arg9[%c50_188, %c0_189] : memref<75x16xf32, #tpu.memory_space<vmem>>, vector<5x16xf32>
    tpu.vector_store %arg9[%c50_188, %c0_189], %295 {strides = array<i32>} : memref<75x16xf32, #tpu.memory_space<vmem>>, vector<5x16xf32>,
    %c0_190 = arith.constant 0 : index
    %c16_191 = arith.constant 16 : index
    %297 = vector.load %arg8[%c0_190, %c16_191] : memref<5x240xf32, #tpu.memory_space<vmem>>, vector<5x16xf32>
    %c5_192 = arith.constant 5 : index
    %c0_193 = arith.constant 0 : index
    %298 = vector.load %arg9[%c5_192, %c0_193] : memref<75x16xf32, #tpu.memory_space<vmem>>, vector<5x16xf32>
    tpu.vector_store %arg9[%c5_192, %c0_193], %297 {strides = array<i32>} : memref<75x16xf32, #tpu.memory_space<vmem>>, vector<5x16xf32>,
    %c0_194 = arith.constant 0 : index
    %c96_195 = arith.constant 96 : index
    %299 = vector.load %arg8[%c0_194, %c96_195] : memref<5x240xf32, #tpu.memory_space<vmem>>, vector<5x16xf32>
    %c30_196 = arith.constant 30 : index
    %c0_197 = arith.constant 0 : index
    %300 = vector.load %arg9[%c30_196, %c0_197] : memref<75x16xf32, #tpu.memory_space<vmem>>, vector<5x16xf32>
    tpu.vector_store %arg9[%c30_196, %c0_197], %299 {strides = array<i32>} : memref<75x16xf32, #tpu.memory_space<vmem>>, vector<5x16xf32>,
    %c0_198 = arith.constant 0 : index
    %c176_199 = arith.constant 176 : index
    %301 = vector.load %arg8[%c0_198, %c176_199] : memref<5x240xf32, #tpu.memory_space<vmem>>, vector<5x16xf32>
    %c55_200 = arith.constant 55 : index
    %c0_201 = arith.constant 0 : index
    %302 = vector.load %arg9[%c55_200, %c0_201] : memref<75x16xf32, #tpu.memory_space<vmem>>, vector<5x16xf32>
    tpu.vector_store %arg9[%c55_200, %c0_201], %301 {strides = array<i32>} : memref<75x16xf32, #tpu.memory_space<vmem>>, vector<5x16xf32>,
    %c0_202 = arith.constant 0 : index
    %c32_203 = arith.constant 32 : index
    %303 = vector.load %arg8[%c0_202, %c32_203] : memref<5x240xf32, #tpu.memory_space<vmem>>, vector<5x16xf32>
    %c10_204 = arith.constant 10 : index
    %c0_205 = arith.constant 0 : index
    %304 = vector.load %arg9[%c10_204, %c0_205] : memref<75x16xf32, #tpu.memory_space<vmem>>, vector<5x16xf32>
    tpu.vector_store %arg9[%c10_204, %c0_205], %303 {strides = array<i32>} : memref<75x16xf32, #tpu.memory_space<vmem>>, vector<5x16xf32>,
    %c0_206 = arith.constant 0 : index
    %c112_207 = arith.constant 112 : index
    %305 = vector.load %arg8[%c0_206, %c112_207] : memref<5x240xf32, #tpu.memory_space<vmem>>, vector<5x16xf32>
    %c35_208 = arith.constant 35 : index
    %c0_209 = arith.constant 0 : index
    %306 = vector.load %arg9[%c35_208, %c0_209] : memref<75x16xf32, #tpu.memory_space<vmem>>, vector<5x16xf32>
    tpu.vector_store %arg9[%c35_208, %c0_209], %305 {strides = array<i32>} : memref<75x16xf32, #tpu.memory_space<vmem>>, vector<5x16xf32>,
    %c0_210 = arith.constant 0 : index
    %c192_211 = arith.constant 192 : index
    %307 = vector.load %arg8[%c0_210, %c192_211] : memref<5x240xf32, #tpu.memory_space<vmem>>, vector<5x16xf32>
    %c60_212 = arith.constant 60 : index
    %c0_213 = arith.constant 0 : index
    %308 = vector.load %arg9[%c60_212, %c0_213] : memref<75x16xf32, #tpu.memory_space<vmem>>, vector<5x16xf32>
    tpu.vector_store %arg9[%c60_212, %c0_213], %307 {strides = array<i32>} : memref<75x16xf32, #tpu.memory_space<vmem>>, vector<5x16xf32>,
    %c0_214 = arith.constant 0 : index
    %c48_215 = arith.constant 48 : index
    %309 = vector.load %arg8[%c0_214, %c48_215] : memref<5x240xf32, #tpu.memory_space<vmem>>, vector<5x16xf32>
    %c15_216 = arith.constant 15 : index
    %c0_217 = arith.constant 0 : index
    %310 = vector.load %arg9[%c15_216, %c0_217] : memref<75x16xf32, #tpu.memory_space<vmem>>, vector<5x16xf32>
    tpu.vector_store %arg9[%c15_216, %c0_217], %309 {strides = array<i32>} : memref<75x16xf32, #tpu.memory_space<vmem>>, vector<5x16xf32>,
    %c0_218 = arith.constant 0 : index
    %c128_219 = arith.constant 128 : index
    %311 = vector.load %arg8[%c0_218, %c128_219] : memref<5x240xf32, #tpu.memory_space<vmem>>, vector<5x16xf32>
    %c40_220 = arith.constant 40 : index
    %c0_221 = arith.constant 0 : index
    %312 = vector.load %arg9[%c40_220, %c0_221] : memref<75x16xf32, #tpu.memory_space<vmem>>, vector<5x16xf32>
    tpu.vector_store %arg9[%c40_220, %c0_221], %311 {strides = array<i32>} : memref<75x16xf32, #tpu.memory_space<vmem>>, vector<5x16xf32>,
    %c0_222 = arith.constant 0 : index
    %c208_223 = arith.constant 208 : index
    %313 = vector.load %arg8[%c0_222, %c208_223] : memref<5x240xf32, #tpu.memory_space<vmem>>, vector<5x16xf32>
    %c65_224 = arith.constant 65 : index
    %c0_225 = arith.constant 0 : index
    %314 = vector.load %arg9[%c65_224, %c0_225] : memref<75x16xf32, #tpu.memory_space<vmem>>, vector<5x16xf32>
    tpu.vector_store %arg9[%c65_224, %c0_225], %313 {strides = array<i32>} : memref<75x16xf32, #tpu.memory_space<vmem>>, vector<5x16xf32>,
    %c0_226 = arith.constant 0 : index
    %c64_227 = arith.constant 64 : index
    %315 = vector.load %arg8[%c0_226, %c64_227] : memref<5x240xf32, #tpu.memory_space<vmem>>, vector<5x16xf32>
    %c20_228 = arith.constant 20 : index
    %c0_229 = arith.constant 0 : index
    %316 = vector.load %arg9[%c20_228, %c0_229] : memref<75x16xf32, #tpu.memory_space<vmem>>, vector<5x16xf32>
    tpu.vector_store %arg9[%c20_228, %c0_229], %315 {strides = array<i32>} : memref<75x16xf32, #tpu.memory_space<vmem>>, vector<5x16xf32>,
    %c0_230 = arith.constant 0 : index
    %c144_231 = arith.constant 144 : index
    %317 = vector.load %arg8[%c0_230, %c144_231] : memref<5x240xf32, #tpu.memory_space<vmem>>, vector<5x16xf32>
    %c45_232 = arith.constant 45 : index
    %c0_233 = arith.constant 0 : index
    %318 = vector.load %arg9[%c45_232, %c0_233] : memref<75x16xf32, #tpu.memory_space<vmem>>, vector<5x16xf32>
    tpu.vector_store %arg9[%c45_232, %c0_233], %317 {strides = array<i32>} : memref<75x16xf32, #tpu.memory_space<vmem>>, vector<5x16xf32>,
    %c0_234 = arith.constant 0 : index
    %c224_235 = arith.constant 224 : index
    %319 = vector.load %arg8[%c0_234, %c224_235] : memref<5x240xf32, #tpu.memory_space<vmem>>, vector<5x16xf32>
    %c70_236 = arith.constant 70 : index
    %c0_237 = arith.constant 0 : index
    %320 = vector.load %arg9[%c70_236, %c0_237] : memref<75x16xf32, #tpu.memory_space<vmem>>, vector<5x16xf32>
    tpu.vector_store %arg9[%c70_236, %c0_237], %319 {strides = array<i32>} : memref<75x16xf32, #tpu.memory_space<vmem>>, vector<5x16xf32>,
    %c0_238 = arith.constant 0 : index
    %c0_239 = arith.constant 0 : index
    %321 = vector.load %arg9[%c0_238, %c0_239] : memref<75x16xf32, #tpu.memory_space<vmem>>, vector<25x16xf32>
    %c25_240 = arith.constant 25 : index
    %c0_241 = arith.constant 0 : index
    %322 = vector.load %arg9[%c25_240, %c0_241] : memref<75x16xf32, #tpu.memory_space<vmem>>, vector<25x16xf32>
    %c50_242 = arith.constant 50 : index
    %c0_243 = arith.constant 0 : index
    %323 = vector.load %arg9[%c50_242, %c0_243] : memref<75x16xf32, #tpu.memory_space<vmem>>, vector<25x16xf32>
    %cst_244 = arith.constant dense<0.000000e+00> : vector<25x25xf32>
    %324 = tpu.matmul %321, %322, %cst_244 {dimension_numbers = #tpu.dot_dimension_numbers<[1], [1], [0], [0], [0, 0, 1, 0], [], []>} : vector<25x16xf32>, vector<25x16xf32>, vector<25x25xf32> -> vector<25x25xf32>
    %cst_245 = arith.constant 2.500000e-01 : f32
    %325 = vector.broadcast %cst_245 : f32 to vector<25x25xf32>
    %326 = arith.mulf %324, %325 : vector<25x25xf32>
    %327 = arith.addf %326, %62 : vector<25x25xf32>
    %cst_246 = arith.constant dense<0xFF800000> : vector<25xf32>
    %328 = vector.multi_reduction <maximumf>, %327, %cst_246 [1] : vector<25x25xf32> to vector<25xf32>
    %329 = vector.shape_cast %328 : vector<25xf32> to vector<25x1xf32>
    %330 = vector.broadcast %329 : vector<25x1xf32> to vector<25x25xf32>
    %331 = arith.subf %327, %330 : vector<25x25xf32>
    %332 = math.exp %331 : vector<25x25xf32>
    %cst_247 = arith.constant dense<0.000000e+00> : vector<25xf32>
    %333 = vector.multi_reduction <add>, %332, %cst_247 [1] : vector<25x25xf32> to vector<25xf32>
    %334 = vector.shape_cast %333 : vector<25xf32> to vector<25x1xf32>
    %335 = vector.broadcast %334 : vector<25x1xf32> to vector<25x25xf32>
    %336 = arith.divf %332, %335 : vector<25x25xf32>
    %cst_248 = arith.constant dense<0.000000e+00> : vector<25x16xf32>
    %337 = tpu.matmul %336, %323, %cst_248 {dimension_numbers = #tpu.dot_dimension_numbers<[1], [0], [0], [1], [0, 0, 1, 1], [], []>} : vector<25x25xf32>, vector<25x16xf32>, vector<25x16xf32> -> vector<25x16xf32>
    %c0_249 = arith.constant 0 : index
    %c0_250 = arith.constant 0 : index
    %338 = vector.load %arg10[%c0_249, %c0_250] : memref<25x16xf32, #tpu.memory_space<vmem>>, vector<25x16xf32>
    tpu.vector_store %arg10[%c0_249, %c0_250], %337 {strides = array<i32>} : memref<25x16xf32, #tpu.memory_space<vmem>>, vector<25x16xf32>,
    %c0_251 = arith.constant 0 : index
    %c0_252 = arith.constant 0 : index
    %339 = vector.load %arg10[%c0_251, %c0_252] : memref<25x16xf32, #tpu.memory_space<vmem>>, vector<5x16xf32>
    %c0_253 = arith.constant 0 : index
    %c0_254 = arith.constant 0 : index
    %340 = vector.load %arg11[%c0_253, %c0_254] : memref<5x80xf32, #tpu.memory_space<vmem>>, vector<5x16xf32>
    tpu.vector_store %arg11[%c0_253, %c0_254], %339 {strides = array<i32>} : memref<5x80xf32, #tpu.memory_space<vmem>>, vector<5x16xf32>,
    %c5_255 = arith.constant 5 : index
    %c0_256 = arith.constant 0 : index
    %341 = vector.load %arg10[%c5_255, %c0_256] : memref<25x16xf32, #tpu.memory_space<vmem>>, vector<5x16xf32>
    %c0_257 = arith.constant 0 : index
    %c16_258 = arith.constant 16 : index
    %342 = vector.load %arg11[%c0_257, %c16_258] : memref<5x80xf32, #tpu.memory_space<vmem>>, vector<5x16xf32>
    tpu.vector_store %arg11[%c0_257, %c16_258], %341 {strides = array<i32>} : memref<5x80xf32, #tpu.memory_space<vmem>>, vector<5x16xf32>,
    %c10_259 = arith.constant 10 : index
    %c0_260 = arith.constant 0 : index
    %343 = vector.load %arg10[%c10_259, %c0_260] : memref<25x16xf32, #tpu.memory_space<vmem>>, vector<5x16xf32>
    %c0_261 = arith.constant 0 : index
    %c32_262 = arith.constant 32 : index
    %344 = vector.load %arg11[%c0_261, %c32_262] : memref<5x80xf32, #tpu.memory_space<vmem>>, vector<5x16xf32>
    tpu.vector_store %arg11[%c0_261, %c32_262], %343 {strides = array<i32>} : memref<5x80xf32, #tpu.memory_space<vmem>>, vector<5x16xf32>,
    %c15_263 = arith.constant 15 : index
    %c0_264 = arith.constant 0 : index
    %345 = vector.load %arg10[%c15_263, %c0_264] : memref<25x16xf32, #tpu.memory_space<vmem>>, vector<5x16xf32>
    %c0_265 = arith.constant 0 : index
    %c48_266 = arith.constant 48 : index
    %346 = vector.load %arg11[%c0_265, %c48_266] : memref<5x80xf32, #tpu.memory_space<vmem>>, vector<5x16xf32>
    tpu.vector_store %arg11[%c0_265, %c48_266], %345 {strides = array<i32>} : memref<5x80xf32, #tpu.memory_space<vmem>>, vector<5x16xf32>,
    %c20_267 = arith.constant 20 : index
    %c0_268 = arith.constant 0 : index
    %347 = vector.load %arg10[%c20_267, %c0_268] : memref<25x16xf32, #tpu.memory_space<vmem>>, vector<5x16xf32>
    %c0_269 = arith.constant 0 : index
    %c64_270 = arith.constant 64 : index
    %348 = vector.load %arg11[%c0_269, %c64_270] : memref<5x80xf32, #tpu.memory_space<vmem>>, vector<5x16xf32>
    tpu.vector_store %arg11[%c0_269, %c64_270], %347 {strides = array<i32>} : memref<5x80xf32, #tpu.memory_space<vmem>>, vector<5x16xf32>,
    %c0_271 = arith.constant 0 : index
    %c0_272 = arith.constant 0 : index
    %349 = vector.load %arg11[%c0_271, %c0_272] : memref<5x80xf32, #tpu.memory_space<vmem>>, vector<5x80xf32>
    %c1_273 = arith.constant 1 : index
    %c0_274 = arith.constant 0 : index
    %c0_275 = arith.constant 0 : index
    %350 = vector.load %arg6[%c1_273, %c0_274, %c0_275] : memref<2x144x32xf32, #tpu.memory_space<vmem>>, vector<1x80x32xf32>
    %351 = vector.shape_cast %350 : vector<1x80x32xf32> to vector<80x32xf32>
    %cst_276 = arith.constant dense<0.000000e+00> : vector<5x32xf32>
    %352 = tpu.matmul %349, %351, %cst_276 {dimension_numbers = #tpu.dot_dimension_numbers<[1], [0], [0], [1], [0, 0, 1, 1], [], []>} : vector<5x80xf32>, vector<80x32xf32>, vector<5x32xf32> -> vector<5x32xf32>
    %c1_277 = arith.constant 1 : index
    %c4_278 = arith.constant 4 : index
    %c0_279 = arith.constant 0 : index
    %353 = vector.load %arg4[%c1_277, %c4_278, %c0_279] : memref<2x9x64xf32, #tpu.memory_space<vmem>>, vector<1x1x32xf32>
    %354 = vector.shape_cast %353 : vector<1x1x32xf32> to vector<1x32xf32>
    %355 = vector.broadcast %354 : vector<1x32xf32> to vector<5x32xf32>
    %356 = arith.addf %352, %355 : vector<5x32xf32>
    %357 = arith.addf %356, %234 : vector<5x32xf32>
    %c1_280 = arith.constant 1 : index
    %c5_281 = arith.constant 5 : index
    %c0_282 = arith.constant 0 : index
    %358 = vector.load %arg4[%c1_280, %c5_281, %c0_282] : memref<2x9x64xf32, #tpu.memory_space<vmem>>, vector<1x1x32xf32>
    %359 = vector.shape_cast %358 : vector<1x1x32xf32> to vector<1x32xf32>
    %c1_283 = arith.constant 1 : index
    %c6_284 = arith.constant 6 : index
    %c0_285 = arith.constant 0 : index
    %360 = vector.load %arg4[%c1_283, %c6_284, %c0_285] : memref<2x9x64xf32, #tpu.memory_space<vmem>>, vector<1x1x32xf32>
    %361 = vector.shape_cast %360 : vector<1x1x32xf32> to vector<1x32xf32>
    %cst_286 = arith.constant dense<0.000000e+00> : vector<5xf32>
    %362 = vector.multi_reduction <add>, %357, %cst_286 [1] : vector<5x32xf32> to vector<5xf32>
    %363 = vector.shape_cast %362 : vector<5xf32> to vector<5x1xf32>
    %cst_287 = arith.constant 3.200000e+01 : f32
    %364 = vector.broadcast %cst_287 : f32 to vector<5x1xf32>
    %365 = arith.divf %363, %364 : vector<5x1xf32>
    %366 = vector.broadcast %365 : vector<5x1xf32> to vector<5x32xf32>
    %367 = arith.subf %357, %366 : vector<5x32xf32>
    %368 = arith.mulf %367, %367 : vector<5x32xf32>
    %cst_288 = arith.constant dense<0.000000e+00> : vector<5xf32>
    %369 = vector.multi_reduction <add>, %368, %cst_288 [1] : vector<5x32xf32> to vector<5xf32>
    %370 = vector.shape_cast %369 : vector<5xf32> to vector<5x1xf32>
    %cst_289 = arith.constant 3.200000e+01 : f32
    %371 = vector.broadcast %cst_289 : f32 to vector<5x1xf32>
    %372 = arith.divf %370, %371 : vector<5x1xf32>
    %373 = vector.broadcast %365 : vector<5x1xf32> to vector<5x32xf32>
    %374 = arith.subf %357, %373 : vector<5x32xf32>
    %cst_290 = arith.constant 9.99999974E-6 : f32
    %375 = vector.broadcast %cst_290 : f32 to vector<5x1xf32>
    %376 = arith.addf %372, %375 : vector<5x1xf32>
    %377 = math.rsqrt %376 : vector<5x1xf32>
    %378 = vector.broadcast %377 : vector<5x1xf32> to vector<5x32xf32>
    %379 = arith.mulf %374, %378 : vector<5x32xf32>
    %380 = vector.broadcast %359 : vector<1x32xf32> to vector<5x32xf32>
    %381 = arith.mulf %379, %380 : vector<5x32xf32>
    %382 = vector.broadcast %361 : vector<1x32xf32> to vector<5x32xf32>
    %383 = arith.addf %381, %382 : vector<5x32xf32>
    %c1_291 = arith.constant 1 : index
    %c0_292 = arith.constant 0 : index
    %c240_293 = arith.constant 240 : index
    %384 = vector.load %arg5[%c1_291, %c0_292, %c240_293] : memref<2x32x304xf32, #tpu.memory_space<vmem>>, vector<1x32x64xf32>
    %385 = vector.shape_cast %384 : vector<1x32x64xf32> to vector<32x64xf32>
    %cst_294 = arith.constant dense<0.000000e+00> : vector<5x64xf32>
    %386 = tpu.matmul %383, %385, %cst_294 {dimension_numbers = #tpu.dot_dimension_numbers<[1], [0], [0], [1], [0, 0, 1, 1], [], []>} : vector<5x32xf32>, vector<32x64xf32>, vector<5x64xf32> -> vector<5x64xf32>
    %c1_295 = arith.constant 1 : index
    %c8_296 = arith.constant 8 : index
    %c0_297 = arith.constant 0 : index
    %387 = vector.load %arg4[%c1_295, %c8_296, %c0_297] : memref<2x9x64xf32, #tpu.memory_space<vmem>>, vector<1x1x64xf32>
    %388 = vector.shape_cast %387 : vector<1x1x64xf32> to vector<1x64xf32>
    %389 = vector.broadcast %388 : vector<1x64xf32> to vector<5x64xf32>
    %390 = arith.addf %386, %389 : vector<5x64xf32>
    %cst_298 = arith.constant 5.000000e-01 : f32
    %391 = vector.broadcast %cst_298 : f32 to vector<5x64xf32>
    %392 = arith.mulf %391, %390 : vector<5x64xf32>
    %cst_299 = arith.constant 0.707106769 : f32
    %393 = vector.broadcast %cst_299 : f32 to vector<5x64xf32>
    %394 = arith.mulf %390, %393 : vector<5x64xf32>
    %395 = math.erf %394 : vector<5x64xf32>
    %cst_300 = arith.constant 1.000000e+00 : f32
    %396 = vector.broadcast %cst_300 : f32 to vector<5x64xf32>
    %397 = arith.addf %396, %395 : vector<5x64xf32>
    %398 = arith.mulf %392, %397 : vector<5x64xf32>
    %c1_301 = arith.constant 1 : index
    %c80_302 = arith.constant 80 : index
    %c0_303 = arith.constant 0 : index
    %399 = vector.load %arg6[%c1_301, %c80_302, %c0_303] : memref<2x144x32xf32, #tpu.memory_space<vmem>>, vector<1x64x32xf32>
    %400 = vector.shape_cast %399 : vector<1x64x32xf32> to vector<64x32xf32>
    %cst_304 = arith.constant dense<0.000000e+00> : vector<5x32xf32>
    %401 = tpu.matmul %398, %400, %cst_304 {dimension_numbers = #tpu.dot_dimension_numbers<[1], [0], [0], [1], [0, 0, 1, 1], [], []>} : vector<5x64xf32>, vector<64x32xf32>, vector<5x32xf32> -> vector<5x32xf32>
    %c1_305 = arith.constant 1 : index
    %c7_306 = arith.constant 7 : index
    %c0_307 = arith.constant 0 : index
    %402 = vector.load %arg4[%c1_305, %c7_306, %c0_307] : memref<2x9x64xf32, #tpu.memory_space<vmem>>, vector<1x1x32xf32>
    %403 = vector.shape_cast %402 : vector<1x1x32xf32> to vector<1x32xf32>
    %404 = vector.broadcast %403 : vector<1x32xf32> to vector<5x32xf32>
    %405 = arith.addf %401, %404 : vector<5x32xf32>
    %406 = arith.addf %405, %357 : vector<5x32xf32>
    %407 = vector.extract_strided_slice %406 {offsets = [0, 0], sizes = [1, 32], strides = [1, 1]} : vector<5x32xf32> to vector<1x32xf32>
    %c5_308 = arith.constant 5 : index
    %c0_309 = arith.constant 0 : index
    %408 = vector.load %arg3[%c5_308, %c0_309] : memref<48x192xf32, #tpu.memory_space<vmem>>, vector<1x32xf32>
    %c6_310 = arith.constant 6 : index
    %c0_311 = arith.constant 0 : index
    %409 = vector.load %arg3[%c6_310, %c0_311] : memref<48x192xf32, #tpu.memory_space<vmem>>, vector<1x32xf32>
    %cst_312 = arith.constant dense<0.000000e+00> : vector<1xf32>
    %410 = vector.multi_reduction <add>, %407, %cst_312 [1] : vector<1x32xf32> to vector<1xf32>
    %411 = vector.shape_cast %410 : vector<1xf32> to vector<1x1xf32>
    %cst_313 = arith.constant 3.200000e+01 : f32
    %412 = vector.broadcast %cst_313 : f32 to vector<1x1xf32>
    %413 = arith.divf %411, %412 : vector<1x1xf32>
    %414 = vector.broadcast %413 : vector<1x1xf32> to vector<1x32xf32>
    %415 = arith.subf %407, %414 : vector<1x32xf32>
    %416 = arith.mulf %415, %415 : vector<1x32xf32>
    %cst_314 = arith.constant dense<0.000000e+00> : vector<1xf32>
    %417 = vector.multi_reduction <add>, %416, %cst_314 [1] : vector<1x32xf32> to vector<1xf32>
    %418 = vector.shape_cast %417 : vector<1xf32> to vector<1x1xf32>
    %cst_315 = arith.constant 3.200000e+01 : f32
    %419 = vector.broadcast %cst_315 : f32 to vector<1x1xf32>
    %420 = arith.divf %418, %419 : vector<1x1xf32>
    %421 = vector.broadcast %413 : vector<1x1xf32> to vector<1x32xf32>
    %422 = arith.subf %407, %421 : vector<1x32xf32>
    %cst_316 = arith.constant 9.99999974E-6 : f32
    %423 = vector.broadcast %cst_316 : f32 to vector<1x1xf32>
    %424 = arith.addf %420, %423 : vector<1x1xf32>
    %425 = math.rsqrt %424 : vector<1x1xf32>
    %426 = vector.broadcast %425 : vector<1x1xf32> to vector<1x32xf32>
    %427 = arith.mulf %422, %426 : vector<1x32xf32>
    %428 = arith.mulf %427, %408 : vector<1x32xf32>
    %429 = arith.addf %428, %409 : vector<1x32xf32>
    %c13 = arith.constant 13 : index
    %c0_317 = arith.constant 0 : index
    %430 = vector.load %arg3[%c13, %c0_317] : memref<48x192xf32, #tpu.memory_space<vmem>>, vector<10x32xf32>
    %cst_318 = arith.constant dense<0.000000e+00> : vector<1x10xf32>
    %431 = tpu.matmul %429, %430, %cst_318 {dimension_numbers = #tpu.dot_dimension_numbers<[1], [1], [0], [0], [0, 0, 1, 0], [], []>} : vector<1x32xf32>, vector<10x32xf32>, vector<1x10xf32> -> vector<1x10xf32>
    %c7_319 = arith.constant 7 : index
    %c0_320 = arith.constant 0 : index
    %432 = vector.load %arg3[%c7_319, %c0_320] : memref<48x192xf32, #tpu.memory_space<vmem>>, vector<1x10xf32>
    %433 = arith.addf %431, %432 : vector<1x10xf32>
    %c0_321 = arith.constant 0 : index
    %c0_322 = arith.constant 0 : index
    %c0_323 = arith.constant 0 : index
    %434 = vector.load %arg7[%c0_321, %c0_322, %c0_323] : memref<1x1x10xf32, #tpu.memory_space<vmem>>, vector<1x1x10xf32>
    %435 = vector.shape_cast %434 : vector<1x1x10xf32> to vector<1x10xf32>
    %436 = vector.shape_cast %433 : vector<1x10xf32> to vector<1x1x10xf32>
    tpu.vector_store %arg7[%c0_321, %c0_322, %c0_323], %436 {strides = array<i32>} : memref<1x1x10xf32, #tpu.memory_space<vmem>>, vector<1x1x10xf32>,
    return
  }
  func.func @transform_0(%arg0: i32) -> (i32, i32, i32) {
    %c0_i32 = arith.constant 0 : i32
    %c0_i32_0 = arith.constant 0 : i32
    %c0_i32_1 = arith.constant 0 : i32
    return %arg0, %c0_i32, %c0_i32_0 : i32, i32, i32
  }
  func.func @transform_1(%arg0: i32) -> (i32, i32) {
    %c0_i32 = arith.constant 0 : i32
    %c0_i32_0 = arith.constant 0 : i32
    %c0_i32_1 = arith.constant 0 : i32
    return %c0_i32, %c0_i32_0 : i32, i32
  }
  func.func @transform_2(%arg0: i32) -> (i32, i32) {
    %c0_i32 = arith.constant 0 : i32
    %c0_i32_0 = arith.constant 0 : i32
    %c0_i32_1 = arith.constant 0 : i32
    return %c0_i32, %c0_i32_0 : i32, i32
  }
  func.func @transform_3(%arg0: i32) -> (i32, i32, i32) {
    %c0_i32 = arith.constant 0 : i32
    %c0_i32_0 = arith.constant 0 : i32
    %c0_i32_1 = arith.constant 0 : i32
    %c0_i32_2 = arith.constant 0 : i32
    return %c0_i32, %c0_i32_0, %c0_i32_1 : i32, i32, i32
  }
  func.func @transform_4(%arg0: i32) -> (i32, i32, i32) {
    %c0_i32 = arith.constant 0 : i32
    %c0_i32_0 = arith.constant 0 : i32
    %c0_i32_1 = arith.constant 0 : i32
    %c0_i32_2 = arith.constant 0 : i32
    return %c0_i32, %c0_i32_0, %c0_i32_1 : i32, i32, i32
  }
  func.func @transform_5(%arg0: i32) -> (i32, i32, i32) {
    %c0_i32 = arith.constant 0 : i32
    %c0_i32_0 = arith.constant 0 : i32
    %c0_i32_1 = arith.constant 0 : i32
    %c0_i32_2 = arith.constant 0 : i32
    return %c0_i32, %c0_i32_0, %c0_i32_1 : i32, i32, i32
  }
  func.func @transform_6(%arg0: i32) -> (i32, i32, i32) {
    %c0_i32 = arith.constant 0 : i32
    %c0_i32_0 = arith.constant 0 : i32
    %c0_i32_1 = arith.constant 0 : i32
    return %arg0, %c0_i32, %c0_i32_0 : i32, i32, i32
  }
}

</mosaic_0001>

<llo_original>
// kernel: vit_forward.1
$region0: #{vit_forward.1}
  #allocation0 [shape = 'u32[]', space=smem, size = 0x4, offset = 0x4, fixed_abs, tag = 'smem constant byte address 0x4 - core index']
  #allocation1 [shape = 'u32[72,128]{1,0:T(1,128)}', space=vmem, size = 0x9000, scoped, tag = 'internal scratch']
  #allocation2 [shape = 'f32[5,240]{1,0:T(8,128)}', space=vmem, size = 0x2000, scoped, tag = 'scratch operand']
  #allocation3 [shape = 'f32[75,16]{1,0:T(8,128)}', space=vmem, size = 0xa000, scoped, tag = 'scratch operand']
  #allocation4 [shape = 'f32[25,16]{1,0:T(8,128)}', space=vmem, size = 0x4000, scoped, tag = 'scratch operand']
  #allocation5 [shape = 'f32[5,80]{1,0:T(8,128)}', space=vmem, size = 0x1000, scoped, tag = 'scratch operand']
  %s0 = inlined_call_operand.vmem [shape: f32[2,5,192], index: 0, kind: input, shape index: {}]
  %s1 = inlined_call_operand.vmem [shape: f32[192,32], index: 1, kind: input, shape index: {}]
  %s2 = inlined_call_operand.vmem [shape: f32[48,192], index: 2, kind: input, shape index: {}]
  %s3 = inlined_call_operand.vmem [shape: f32[2,9,64], index: 3, kind: input, shape index: {}]
  %s4 = inlined_call_operand.vmem [shape: f32[2,32,304], index: 4, kind: input, shape index: {}]
  %s5 = inlined_call_operand.vmem [shape: f32[2,144,32], index: 5, kind: input, shape index: {}]
  %s6 = inlined_call_operand.hbm [shape: f32[2,1,10], index: 6, kind: output, shape index: {}]
  %s7 = sld [smem:[#allocation0]]
  $region57: #{vit_forward.1} parent=0
    _
  %s9 = ssub.s32 1, %s7
  %s10 = scalar_select 0, %s9, %s7
  $region1: #{vit_forward.1} parent=0
    #allocation6 [shape = 'u8[1024]{0}', space=vmem, size = 0x400, scoped, tag = 'output window, operand 0']
    #allocation7 [shape = 's32[2]{0}', space=sflag, size = 0x8, scoped, tag = 'scoped memory for vit_forward.1']
    %11 = vsyncpa [#allocation7], 0
    %s12 = scalar_lea.sflag [#allocation7], 1
    %13 = vsyncpa %s12, 0
    loop: start=0, step=1, limit=4
    $region2: #{vit_forward.1} parent=1 // loop_pre_header
      _
    $region3: #{vit_forward.1} parent=1 // loop_header
      %s15 = sphi 0, %s19
      %p16 = scmp.ge.s32.totalorder %s15, 4
      %s25 = sphi 0, %s27
      %s28 = sphi 0, %s25
      %s29 = sphi 0, %s28
      %s45 = sphi 0, %s29
      %s49 = sphi 0, %s49
      %s51 = sphi 0, %s49
      %s52 = sphi 0, %s51
      %s66 = sphi 0, %s52
      %s70 = sphi 0, %s70
      %s72 = sphi 0, %s70
      %s73 = sphi 0, %s72
      %s87 = sphi 0, %s73
      %s91 = sphi 0, %s91
      %s93 = sphi 0, %s91
      %s94 = sphi 0, %s93
      %s108 = sphi 0, %s94
      %s112 = sphi 0, %s112
      %s114 = sphi 0, %s112
      %s115 = sphi 0, %s114
      %s129 = sphi 0, %s115
      %s133 = sphi 0, %s133
      %s135 = sphi 0, %s133
      %s136 = sphi 0, %s135
      %s150 = sphi 0, %s136
      %s156 = sphi 0, %s158
      %s159 = sphi 0, %s156
      %s160 = sphi 0, %s159
      %s176 = sphi 0, %s160
    $region4: #{vit_forward.1} parent=1 // loop_header_branch
      %18 = sbr.rel (%p16) target = $region8
    $region5: #{vit_forward.1} parent=1 // loop_body
      %s20 = ssub.s32 %s15, 1
      %s21 = ssub.s32 %s15, 2
      %s22 = sadd.s32 %s15, 1
      %s23 = ssub.s32 %s15, %s22
      %p24 = scmp.eq.s32.totalorder %s23, 0
      %s26 = sadd.s32 %s25, 1
      %s27 = scalar_select %p24, %s25, %s26
      %p30 = pneg %p24
      %p31 = scmp.eq.s32.totalorder %s15, 1
      %p32 = por %p30, %p31
      %p33 = scmp.ne.s32.totalorder %s25, %s28
      %p34 = scmp.eq.s32.totalorder %s15, 0
      %p35 = por %p33, %p34
      %p36 = scmp.ne.s32.totalorder %s25, %s28
      %p37 = scmp.eq.s32.totalorder %s20, 1
      %p38 = por %p36, %p37
      %p39 = scmp.ne.s32.totalorder %s28, %s29
      %p40 = scmp.eq.s32.totalorder %s20, 0
      %p41 = por %p39, %p40
      %p42 = scmp.ne.s32.totalorder %s28, %s29
      %p43 = scmp.eq.s32.totalorder %s21, 1
      %p44 = por %p42, %p43
      %p46 = scmp.ne.s32.totalorder %s29, %s45
      %p47 = scmp.eq.s32.totalorder %s21, 0
      %p48 = por %p46, %p47
      %s50 = sadd.s32 %s49, 1
      %p53 = scmp.eq.s32.totalorder %s15, 1
      %p54 = scmp.ne.s32.totalorder %s49, %s51
      %p55 = scmp.eq.s32.totalorder %s15, 0
      %p56 = por %p54, %p55
      %p57 = scmp.ne.s32.totalorder %s49, %s51
      %p58 = scmp.eq.s32.totalorder %s20, 1
      %p59 = por %p57, %p58
      %p60 = scmp.ne.s32.totalorder %s51, %s52
      %p61 = scmp.eq.s32.totalorder %s20, 0
      %p62 = por %p60, %p61
      %p63 = scmp.ne.s32.totalorder %s51, %s52
      %p64 = scmp.eq.s32.totalorder %s21, 1
      %p65 = por %p63, %p64
      %p67 = scmp.ne.s32.totalorder %s52, %s66
      %p68 = scmp.eq.s32.totalorder %s21, 0
      %p69 = por %p67, %p68
      %s71 = sadd.s32 %s70, 1
      %p74 = scmp.eq.s32.totalorder %s15, 1
      %p75 = scmp.ne.s32.totalorder %s70, %s72
      %p76 = scmp.eq.s32.totalorder %s15, 0
      %p77 = por %p75, %p76
      %p78 = scmp.ne.s32.totalorder %s70, %s72
      %p79 = scmp.eq.s32.totalorder %s20, 1
      %p80 = por %p78, %p79
      %p81 = scmp.ne.s32.totalorder %s72, %s73
      %p82 = scmp.eq.s32.totalorder %s20, 0
      %p83 = por %p81, %p82
      %p84 = scmp.ne.s32.totalorder %s72, %s73
      %p85 = scmp.eq.s32.totalorder %s21, 1
      %p86 = por %p84, %p85
      %p88 = scmp.ne.s32.totalorder %s73, %s87
      %p89 = scmp.eq.s32.totalorder %s21, 0
      %p90 = por %p88, %p89
      %s92 = sadd.s32 %s91, 1
      %p95 = scmp.eq.s32.totalorder %s15, 1
      %p96 = scmp.ne.s32.totalorder %s91, %s93
      %p97 = scmp.eq.s32.totalorder %s15, 0
      %p98 = por %p96, %p97
      %p99 = scmp.ne.s32.totalorder %s91, %s93
      %p100 = scmp.eq.s32.totalorder %s20, 1
      %p101 = por %p99, %p100
      %p102 = scmp.ne.s32.totalorder %s93, %s94
      %p103 = scmp.eq.s32.totalorder %s20, 0
      %p104 = por %p102, %p103
      %p105 = scmp.ne.s32.totalorder %s93, %s94
      %p106 = scmp.eq.s32.totalorder %s21, 1
      %p107 = por %p105, %p106
      %p109 = scmp.ne.s32.totalorder %s94, %s108
      %p110 = scmp.eq.s32.totalorder %s21, 0
      %p111 = por %p109, %p110
      %s113 = sadd.s32 %s112, 1
      %p116 = scmp.eq.s32.totalorder %s15, 1
      %p117 = scmp.ne.s32.totalorder %s112, %s114
      %p118 = scmp.eq.s32.totalorder %s15, 0
      %p119 = por %p117, %p118
      %p120 = scmp.ne.s32.totalorder %s112, %s114
      %p121 = scmp.eq.s32.totalorder %s20, 1
      %p122 = por %p120, %p121
      %p123 = scmp.ne.s32.totalorder %s114, %s115
      %p124 = scmp.eq.s32.totalorder %s20, 0
      %p125 = por %p123, %p124
      %p126 = scmp.ne.s32.totalorder %s114, %s115
      %p127 = scmp.eq.s32.totalorder %s21, 1
      %p128 = por %p126, %p127
      %p130 = scmp.ne.s32.totalorder %s115, %s129
      %p131 = scmp.eq.s32.totalorder %s21, 0
      %p132 = por %p130, %p131
      %s134 = sadd.s32 %s133, 1
      %p137 = scmp.eq.s32.totalorder %s15, 1
      %p138 = scmp.ne.s32.totalorder %s133, %s135
      %p139 = scmp.eq.s32.totalorder %s15, 0
      %p140 = por %p138, %p139
      %p141 = scmp.ne.s32.totalorder %s133, %s135
      %p142 = scmp.eq.s32.totalorder %s20, 1
      %p143 = por %p141, %p142
      %p144 = scmp.ne.s32.totalorder %s135, %s136
      %p145 = scmp.eq.s32.totalorder %s20, 0
      %p146 = por %p144, %p145
      %p147 = scmp.ne.s32.totalorder %s135, %s136
      %p148 = scmp.eq.s32.totalorder %s21, 1
      %p149 = por %p147, %p148
      %p151 = scmp.ne.s32.totalorder %s136, %s150
      %p152 = scmp.eq.s32.totalorder %s21, 0
      %p153 = por %p151, %p152
      %s154 = ssub.s32 %s15, %s22
      %p155 = scmp.eq.s32.totalorder %s154, 0
      %s157 = sadd.s32 %s156, 1
      %s158 = scalar_select %p155, %s156, %s157
      %p161 = pneg %p155
      %p162 = scmp.eq.s32.totalorder %s15, 1
      %p163 = por %p161, %p162
      %p164 = scmp.ne.s32.totalorder %s156, %s159
      %p165 = scmp.eq.s32.totalorder %s15, 0
      %p166 = por %p164, %p165
      %p167 = scmp.ne.s32.totalorder %s156, %s159
      %p168 = scmp.eq.s32.totalorder %s20, 1
      %p169 = por %p167, %p168
      %p170 = scmp.ne.s32.totalorder %s159, %s160
      %p171 = scmp.eq.s32.totalorder %s20, 0
      %p172 = por %p170, %p171
      %p173 = scmp.ne.s32.totalorder %s159, %s160
      %p174 = scmp.eq.s32.totalorder %s21, 1
      %p175 = por %p173, %p174
      %p177 = scmp.ne.s32.totalorder %s160, %s176
      %p178 = scmp.eq.s32.totalorder %s21, 0
      %p179 = por %p177, %p178
      %p180 = scmp.le.s32.totalorder 1, %s15
      %p181 = scmp.lt.s32.totalorder %s15, 3
      %p182 = pnand %p180, %p181
      %p183 = pneg %p182
      // Predicated region
      $region9: #{vit_forward.1} parent=5 // pred_check
        _
      $region10: #{vit_forward.1} parent=5 // pred_check_branch
        %185 = sbr.rel (%p182) target = $region12
      $region11: #{vit_forward.1} parent=5 // pred_region
        %s186 = ssub.s32 %s15, 1
        // Predicated region
        $region13: #{vit_forward.1} parent=11 // pred_check
          %p187 = pneg %p62
        $region14: #{vit_forward.1} parent=11 // pred_check_branch
          %189 = sbr.rel (%p187) target = $region16
        $region15: #{vit_forward.1} parent=11 // pred_region
          _
        $region16: #{vit_forward.1} parent=11 // pred_fallthru
          _
        // Predicated region
        $region17: #{vit_forward.1} parent=11 // pred_check
          %p190 = pneg %p83
        $region18: #{vit_forward.1} parent=11 // pred_check_branch
          %192 = sbr.rel (%p190) target = $region20
        $region19: #{vit_forward.1} parent=11 // pred_region
          _
        $region20: #{vit_forward.1} parent=11 // pred_fallthru
          _
        // Predicated region
        $region21: #{vit_forward.1} parent=11 // pred_check
          %p193 = pneg %p104
        $region22: #{vit_forward.1} parent=11 // pred_check_branch
          %195 = sbr.rel (%p193) target = $region24
        $region23: #{vit_forward.1} parent=11 // pred_region
          _
        $region24: #{vit_forward.1} parent=11 // pred_fallthru
          _
        // Predicated region
        $region25: #{vit_forward.1} parent=11 // pred_check
          %p196 = pneg %p125
        $region26: #{vit_forward.1} parent=11 // pred_check_branch
          %198 = sbr.rel (%p196) target = $region28
        $region27: #{vit_forward.1} parent=11 // pred_region
          _
        $region28: #{vit_forward.1} parent=11 // pred_fallthru
          _
        // Predicated region
        $region29: #{vit_forward.1} parent=11 // pred_check
          %p199 = pneg %p146
        $region30: #{vit_forward.1} parent=11 // pred_check_branch
          %201 = sbr.rel (%p199) target = $region32
        $region31: #{vit_forward.1} parent=11 // pred_region
          _
        $region32: #{vit_forward.1} parent=11 // pred_fallthru
          _
      $region12: #{vit_forward.1} parent=5 // pred_fallthru
        _
      %p202 = scmp.lt.s32.totalorder %s15, 2
      // Predicated region
      $region33: #{vit_forward.1} parent=5 // pred_check
        %p203 = pneg %p202
      $region34: #{vit_forward.1} parent=5 // pred_check_branch
        %205 = sbr.rel (%p203) target = $region36
      $region35: #{vit_forward.1} parent=5 // pred_region
        // Predicated region
        $region37: #{vit_forward.1} parent=35 // pred_check
          %p206 = pneg %p35
        $region38: #{vit_forward.1} parent=35 // pred_check_branch
          %208 = sbr.rel (%p206) target = $region40
        $region39: #{vit_forward.1} parent=35 // pred_region
          %p209 = scmp.lt.s32.totalorder %s15, 1
          %s210 = scalar_select %p209, %s15, 1
          %s211 = smul.addr %s210, 2
          %s212 = smul.addr %s211, 8
          %s213 = scalar_lea.vmem %s0, %s212
        $region40: #{vit_forward.1} parent=35 // pred_fallthru
          _
      $region36: #{vit_forward.1} parent=5 // pred_fallthru
        _
      %p214 = scmp.le.s32.totalorder 1, %s15
      %p215 = scmp.lt.s32.totalorder %s15, 3
      %p216 = pnand %p214, %p215
      %p217 = pneg %p216
      // Predicated region
      $region41: #{vit_forward.1} parent=5 // pred_check
        _
      $region42: #{vit_forward.1} parent=5 // pred_check_branch
        %219 = sbr.rel (%p216) target = $region44
      $region43: #{vit_forward.1} parent=5 // pred_region
        %s220 = ssub.s32 %s15, 1
        %p221 = scmp.lt.s32.totalorder %s20, 1
        %s222 = scalar_select %p221, %s20, 1
        %s223 = smul.addr %s222, 2
        %s224 = smul.addr %s223, 8
        %s225 = scalar_lea.vmem %s0, %s224
        %p226 = pneg %p41
        %p227 = pneg %p38
        %p228 = pneg %p62
        %p229 = pneg %p59
        %p230 = pneg %p83
        %p231 = pneg %p80
        %p232 = pneg %p104
        %p233 = pneg %p101
        %p234 = pneg %p125
        %p235 = pneg %p122
        %p236 = pneg %p146
        %p237 = pneg %p143
        %p238 = pneg %p172
        %p239 = pneg %p169
        %s240 = sand.u32 %s159, 1
        %s241 = scalar_lea.sflag [#allocation7], %s240
        %s242 = sand.u32 %s159, 1
        %s243 = scalar_lea.vmem [#allocation6], %s242
        %p244 = scmp.lt.s32.totalorder %s20, 1
        %s245 = scalar_select %p244, %s20, 1
        %s246 = smul.addr %s245, 2
        %s247 = smul.addr %s246, 8
        %s248 = scalar_lea.vmem %s0, %s247
        %v249 = vld [vmem:[%s248] sm:$0x1f]
        %v250 = vld [vmem:[%s248 + $0x8] sm:$0x1f]
        %v251 = vld [vmem:[%s2] ss:$8 sm:$0x3]
        %s252 = scalar_lea.vmem %s2, 1
        %v253 = vld [vmem:[%s252] ss:$8 sm:$0x3]
        %vm254 = vcmask 1044480
        %v255 = vsel %vm254, %v249, 0.0
        %vm256 = vcmask 520192
        %v257 = vsel %vm256, %v250, 0.0
        %v258 = vadd.f32 %v255, %v257
        %259 = vadd.xlane.f32.xlu0 %v258
        %v260 = vpop.xlane.xlu0 %259
        %v261 = vrcp.pop 192.0
        %v262 = vmul.f32 192.0, %v261
        %v263 = vsub.f32 1.0, %v262
        %v264 = vmul.f32 %v261, %v263
        %v265 = vadd.f32 %v261, %v264
        %vm266 = vweird.f32 %v261
        %v267 = vsel %vm266, %v261, %v265
        %v268 = vmul.f32 %v260, %v267
        %v269 = vsub.f32 %v249, %v268
        %v270 = vsub.f32 %v250, %v268
        %v271 = vmul.f32 %v269, %v269
        %v272 = vmul.f32 %v270, %v270
        %v273 = vsel %vm254, %v271, 0.0
        %v274 = vsel %vm256, %v272, 0.0
        %v275 = vadd.f32 %v273, %v274
        %276 = vadd.xlane.f32.xlu0 %v275
        %v277 = vpop.xlane.xlu0 %276
        %v278 = vmul.f32 %v277, %v267
        %v279 = vadd.f32 %v278, 1e-05
        %v280 = vrsqrt.pop %v279
        %v281 = vmul.f32 %v280, %v279
        %v282 = vmul.f32 %v281, %v280
        %v283 = vmul.f32 0.5, %v282
        %v284 = vsub.f32 1.5, %v283
        %v285 = vmul.f32 %v280, %v284
        %vm286 = vweird.f32 %v279
        %vm287 = vweird.f32 %v280
        %vm288 = vmor %vm286, %vm287
        %v289 = vsel %vm288, %v280, %v285
        %v290 = vmul.f32 %v269, %v289
        %v291 = vmul.f32 %v270, %v289
        %v293 = vperm.slane %v251, 0
        %v294 = vperm.slane %v251, 1
        %v297 = vmul.f32 %v290, %v293
        %v298 = vmul.f32 %v291, %v294
        %v300 = vperm.slane %v253, 0
        %v301 = vperm.slane %v253, 1
        %v304 = vadd.f32 %v297, %v300
        %v305 = vadd.f32 %v298, %v301
        %v306 = vld [vmem:[%s1] sm:$0xff]
        %v307 = vld [vmem:[%s1 + $0x8] sm:$0xff]
        %v308 = vld [vmem:[%s1 + $0x10] sm:$0xff]
        %v309 = vld [vmem:[%s1 + $0x18] sm:$0xff]
        %v310 = vld [vmem:[%s1 + $0x20] sm:$0xff]
        %v311 = vld [vmem:[%s1 + $0x28] sm:$0xff]
        %v312 = vld [vmem:[%s1 + $0x30] sm:$0xff]
        %v313 = vld [vmem:[%s1 + $0x38] sm:$0xff]
        %v314 = vld [vmem:[%s1 + $0x40] sm:$0xff]
        %v315 = vld [vmem:[%s1 + $0x48] sm:$0xff]
        %v316 = vld [vmem:[%s1 + $0x50] sm:$0xff]
        %v317 = vld [vmem:[%s1 + $0x58] sm:$0xff]
        %v318 = vld [vmem:[%s1 + $0x60] sm:$0xff]
        %v319 = vld [vmem:[%s1 + $0x68] sm:$0xff]
        %v320 = vld [vmem:[%s1 + $0x70] sm:$0xff]
        %v321 = vld [vmem:[%s1 + $0x78] sm:$0xff]
        %v322 = vld [vmem:[%s1 + $0x80] sm:$0xff]
        %v323 = vld [vmem:[%s1 + $0x88] sm:$0xff]
        %v324 = vld [vmem:[%s1 + $0x90] sm:$0xff]
        %v325 = vld [vmem:[%s1 + $0x98] sm:$0xff]
        %v326 = vld [vmem:[%s1 + $0xa0] sm:$0xff]
        %v327 = vld [vmem:[%s1 + $0xa8] sm:$0xff]
        %v328 = vld [vmem:[%s1 + $0xb0] sm:$0xff]
        %v329 = vld [vmem:[%s1 + $0xb8] sm:$0xff]
        %v330 = vld [vmem:[%s2 + $0x2] ss:$0 sm:$0xff]
        %vm331 = vcmask 523264
        %v333 = vsel %vm331, %v305, 0
        %335 = vmatpush.msra.mxu0 %v321
        %336 = vmatpush.msra.mxu0 %v320
        %337 = vmatpush.msra.mxu0 %v319
        %338 = vmatpush.msra.mxu0 %v318
        %339 = vmatpush.msra.mxu0 %v317
        %340 = vmatpush.msra.mxu0 %v316
        %341 = vmatpush.msra.mxu0 %v315
        %342 = vmatpush.msra.mxu0 %v314
        %343 = vmatpush.msra.mxu0 %v313
        %344 = vmatpush.msra.mxu0 %v312
        %345 = vmatpush.msra.mxu0 %v311
        %346 = vmatpush.msra.mxu0 %v310
        %347 = vmatpush.msra.mxu0 %v309
        %348 = vmatpush.msra.mxu0 %v308
        %349 = vmatpush.msra.mxu0 %v307
        %350 = vmatpush.msra.mxu0 %v306
        %351 = vmatmul.f32.gmra.mxu0 %v304
        %v352 = vpop.f32.mrf.mxu0
        %v353 = vadd.f32 %v330, %v352
        %354 = vdwg.mxu0
        %355 = vmatpush.msra.mxu0 0.0
        %356 = vmatpush.msra.mxu0 0.0
        %357 = vmatpush.msra.mxu0 0.0
        %358 = vmatpush.msra.mxu0 0.0
        %359 = vmatpush.msra.mxu0 0.0
        %360 = vmatpush.msra.mxu0 0.0
        %361 = vmatpush.msra.mxu0 0.0
        %362 = vmatpush.msra.mxu0 0.0
        %363 = vmatpush.msra.mxu0 %v329
        %364 = vmatpush.msra.mxu0 %v328
        %365 = vmatpush.msra.mxu0 %v327
        %366 = vmatpush.msra.mxu0 %v326
        %367 = vmatpush.msra.mxu0 %v325
        %368 = vmatpush.msra.mxu0 %v324
        %369 = vmatpush.msra.mxu0 %v323
        %370 = vmatpush.msra.mxu0 %v322
        %371 = vmatmul.f32.gmra.mxu0 %v333
        %v372 = vpop.f32.mrf.mxu0
        %v373 = vadd.f32 %v353, %v372
        %374 = vdwg.mxu0
        %v375 = vld [vmem:[%s2 + $0x3] ss:$0 sm:$0xff]
        %v376 = vld [vmem:[%s2 + $0x4] ss:$0 sm:$0xff]
        %vm377 = vcmask 258048
        %v378 = vsel %vm377, %v373, 0.0
        %379 = vadd.xlane.f32.xlu0 %v378
        %v380 = vpop.xlane.xlu0 %379
        %v381 = vrcp.pop 32.0
        %v382 = vmul.f32 32.0, %v381
        %v383 = vsub.f32 1.0, %v382
        %v384 = vmul.f32 %v381, %v383
        %v385 = vadd.f32 %v381, %v384
        %vm386 = vweird.f32 %v381
        %v387 = vsel %vm386, %v381, %v385
        %v388 = vmul.f32 %v380, %v387
        %v389 = vsub.f32 %v373, %v388
        %v390 = vmul.f32 %v389, %v389
        %v391 = vsel %vm377, %v390, 0.0
        %392 = vadd.xlane.f32.xlu0 %v391
        %v393 = vpop.xlane.xlu0 %392
        %v394 = vmul.f32 %v393, %v387
        %v395 = vadd.f32 %v394, 1e-05
        %v396 = vrsqrt.pop %v395
        %v397 = vmul.f32 %v396, %v395
        %v398 = vmul.f32 %v397, %v396
        %v399 = vmul.f32 0.5, %v398
        %v400 = vsub.f32 1.5, %v399
        %v401 = vmul.f32 %v396, %v400
        %vm402 = vweird.f32 %v395
        %vm403 = vweird.f32 %v396
        %vm404 = vmor %vm402, %vm403
        %v405 = vsel %vm404, %v396, %v401
        %v406 = vmul.f32 %v389, %v405
        %v407 = vmul.f32 %v406, %v375
        %v408 = vadd.f32 %v407, %v376
        %v409 = vld [vmem:[%s2 + $0x10] sm:$0x1f]
        %v410 = vlaneseq
        %v411 = vshrl.u32 %v410, 7
        %vm412 = vcmp.eq.s32.totalorder %v411, 0
        %v413 = vsel %vm412, 0.0, %v408
        %v414 = vadd.f32 %v409, %v413
        %v415 = vld [vmem:[%s2 + $0x20] sm:$0x80]
        %v416 = vld [vmem:[%s2 + $0x30] sm:$0xff]
        %v417 = vld [vmem:[%s2 + $0x40] sm:$0xff]
        %v418 = vld [vmem:[%s2 + $0x50] sm:$0xff]
        %v419 = vld [vmem:[%s3] sm:$0x1]
        %v420 = vld [vmem:[%s3 + $0x1] sm:$0x1]
        %v421 = vsel %vm377, %v414, 0.0
        %422 = vadd.xlane.f32.xlu0 %v421
        %v423 = vpop.xlane.xlu0 %422
        %v424 = vmul.f32 %v423, %v387
        %v425 = vsub.f32 %v414, %v424
        %v426 = vmul.f32 %v425, %v425
        %v427 = vsel %vm377, %v426, 0.0
        %428 = vadd.xlane.f32.xlu0 %v427
        %v429 = vpop.xlane.xlu0 %428
        %v430 = vmul.f32 %v429, %v387
        %v431 = vadd.f32 %v430, 1e-05
        %v432 = vrsqrt.pop %v431
        %v433 = vmul.f32 %v432, %v431
        %v434 = vmul.f32 %v433, %v432
        %v435 = vmul.f32 0.5, %v434
        %v436 = vsub.f32 1.5, %v435
        %v437 = vmul.f32 %v432, %v436
        %vm438 = vweird.f32 %v431
        %vm439 = vweird.f32 %v432
        %vm440 = vmor %vm438, %vm439
        %v441 = vsel %vm440, %v432, %v437
        %v442 = vmul.f32 %v425, %v441
        %v443 = vperm.slane %v419, 0
        %v444 = vmul.f32 %v442, %v443
        %v445 = vperm.slane %v420, 0
        %v446 = vadd.f32 %v444, %v445
        %v447 = vld [vmem:[%s3 + $0x2] sm:$0x1]
        %v448 = vld [vmem:[%s3 + $0x3] sm:$0x1]
        %v449 = vsel %vm377, %v446, 0.0
        %450 = vadd.xlane.f32.xlu0 %v449
        %v451 = vpop.xlane.xlu0 %450
        %v452 = vmul.f32 %v451, %v387
        %v453 = vsub.f32 %v446, %v452
        %v454 = vmul.f32 %v453, %v453
        %v455 = vsel %vm377, %v454, 0.0
        %456 = vadd.xlane.f32.xlu0 %v455
        %v457 = vpop.xlane.xlu0 %456
        %v458 = vmul.f32 %v457, %v387
        %v459 = vadd.f32 %v458, 1e-05
        %v460 = vrsqrt.pop %v459
        %v461 = vmul.f32 %v460, %v459
        %v462 = vmul.f32 %v461, %v460
        %v463 = vmul.f32 0.5, %v462
        %v464 = vsub.f32 1.5, %v463
        %v465 = vmul.f32 %v460, %v464
        %vm466 = vweird.f32 %v459
        %vm467 = vweird.f32 %v460
        %vm468 = vmor %vm466, %vm467
        %v469 = vsel %vm468, %v460, %v465
        %v470 = vmul.f32 %v453, %v469
        %v471 = vperm.slane %v447, 0
        %v472 = vmul.f32 %v470, %v471
        %v473 = vperm.slane %v448, 0
        %v474 = vadd.f32 %v472, %v473
        %v475 = vld [vmem:[%s4] sm:$0xff]
        %v476 = vld [vmem:[%s4 + $0x8] sm:$0xff]
        %v477 = vld [vmem:[%s4 + $0x18] sm:$0xff]
        %v478 = vld [vmem:[%s4 + $0x20] sm:$0xff]
        %v479 = vld [vmem:[%s4 + $0x30] sm:$0xff]
        %v480 = vld [vmem:[%s4 + $0x38] sm:$0xff]
        %v481 = vld [vmem:[%s4 + $0x48] sm:$0xff]
        %v482 = vld [vmem:[%s4 + $0x50] sm:$0xff]
        %vm483 = vcmask 261120
        %v485 = vsel %vm483, %v474, 0
        %487 = vmatpush.msra.mxu0 0.0
        %488 = vmatpush.msra.mxu0 0.0
        %489 = vmatpush.msra.mxu0 0.0
        %490 = vmatpush.msra.mxu0 0.0
        %491 = vmatpush.msra.mxu0 0.0
        %492 = vmatpush.msra.mxu0 0.0
        %493 = vmatpush.msra.mxu0 0.0
        %494 = vmatpush.msra.mxu0 0.0
        %495 = vmatpush.msra.mxu0 0.0
        %496 = vmatpush.msra.mxu0 0.0
        %497 = vmatpush.msra.mxu0 0.0
        %498 = vmatpush.msra.mxu0 0.0
        %499 = vmatpush.msra.mxu0 %v481
        %500 = vmatpush.msra.mxu0 %v479
        %501 = vmatpush.msra.mxu0 %v477
        %502 = vmatpush.msra.mxu0 %v475
        %503 = vmatmul.f32.gmra.mxu0 %v485
        %v504 = vpop.f32.mrf.mxu0
        %v505 = vadd.f32 0.0, %v504
        %506 = vdwg.mxu0
        %507 = vmatpush.msra.mxu0 0.0
        %508 = vmatpush.msra.mxu0 0.0
        %509 = vmatpush.msra.mxu0 0.0
        %510 = vmatpush.msra.mxu0 0.0
        %511 = vmatpush.msra.mxu0 0.0
        %512 = vmatpush.msra.mxu0 0.0
        %513 = vmatpush.msra.mxu0 0.0
        %514 = vmatpush.msra.mxu0 0.0
        %515 = vmatpush.msra.mxu0 0.0
        %516 = vmatpush.msra.mxu0 0.0
        %517 = vmatpush.msra.mxu0 0.0
        %518 = vmatpush.msra.mxu0 0.0
        %519 = vmatpush.msra.mxu0 %v482
        %520 = vmatpush.msra.mxu0 %v480
        %521 = vmatpush.msra.mxu0 %v478
        %522 = vmatpush.msra.mxu0 %v476
        %523 = vmatmul.f32.gmra.mxu0 %v485
        %v524 = vpop.f32.mrf.mxu0
        %v525 = vadd.f32 0.0, %v524
        %526 = vdwg.mxu0
        %527 = vst [vmem:[#allocation2] sm:$0x1f] %v505
        %vm528 = vcmask 913408
        %529 = vst.msk [vmem:[#allocation2 + $0x8] sm:$0x1f] %vm528, %v525
        %v530 = vld [vmem:[#allocation2] sm:$0x1f]
        %vm531 = vcmask 126976
        %532 = vst.msk [vmem:[#allocation3] sm:$0x1f] %vm531, %v530
        %v533 = vld [vmem:[#allocation2] sm:$0x1f]
        %535 = vrot.lane.b32.xlu0 %v533, 48
        %v536 = vpop.permute.xlu0 %535
        %538 = vst.msk [vmem:[#allocation3 + $0x19] sm:$0x1f] %vm531, %v536
        %v539 = vld [vmem:[#allocation2 + $0x8] sm:$0x1f]
        %541 = vrot.lane.b32.xlu0 %v539, 96
        %v542 = vpop.permute.xlu0 %541
        %544 = vst.msk [vmem:[#allocation3 + $0x32] sm:$0x1f] %vm531, %v542
        %v545 = vld [vmem:[#allocation2] sm:$0x1f]
        %547 = vrot.lane.b32.xlu0 %v545, 112
        %v548 = vpop.permute.xlu0 %547
        %550 = vst.msk [vmem:[#allocation3 + $0x5] sm:$0x1f] %vm531, %v548
        %v551 = vld [vmem:[#allocation2] sm:$0x1f]
        %553 = vrot.lane.b32.xlu0 %v551, 32
        %v554 = vpop.permute.xlu0 %553
        %556 = vst.msk [vmem:[#allocation3 + $0x1e] sm:$0x1f] %vm531, %v554
        %v557 = vld [vmem:[#allocation2 + $0x8] sm:$0x1f]
        %559 = vrot.lane.b32.xlu0 %v557, 80
        %v560 = vpop.permute.xlu0 %559
        %562 = vst.msk [vmem:[#allocation3 + $0x37] sm:$0x1f] %vm531, %v560
        %v563 = vld [vmem:[#allocation2] sm:$0x1f]
        %565 = vrot.lane.b32.xlu0 %v563, 96
        %v566 = vpop.permute.xlu0 %565
        %568 = vst.msk [vmem:[#allocation3 + $0xa] sm:$0x1f] %vm531, %v566
        %v569 = vld [vmem:[#allocation2] sm:$0x1f]
        %571 = vrot.lane.b32.xlu0 %v569, 16
        %v572 = vpop.permute.xlu0 %571
        %574 = vst.msk [vmem:[#allocation3 + $0x23] sm:$0x1f] %vm531, %v572
        %v575 = vld [vmem:[#allocation2 + $0x8] sm:$0x1f]
        %577 = vrot.lane.b32.xlu0 %v575, 64
        %v578 = vpop.permute.xlu0 %577
        %580 = vst.msk [vmem:[#allocation3 + $0x3c] sm:$0x1f] %vm531, %v578
        %v581 = vld [vmem:[#allocation2] sm:$0x1f]
        %583 = vrot.lane.b32.xlu0 %v581, 80
        %v584 = vpop.permute.xlu0 %583
        %586 = vst.msk [vmem:[#allocation3 + $0xf] sm:$0x1f] %vm531, %v584
        %v587 = vld [vmem:[#allocation2 + $0x8] sm:$0x1f]
        %588 = vst.msk [vmem:[#allocation3 + $0x28] sm:$0x1f] %vm531, %v587
        %v589 = vld [vmem:[#allocation2 + $0x8] sm:$0x1f]
        %591 = vrot.lane.b32.xlu0 %v589, 48
        %v592 = vpop.permute.xlu0 %591
        %594 = vst.msk [vmem:[#allocation3 + $0x41] sm:$0x1f] %vm531, %v592
        %v595 = vld [vmem:[#allocation2] sm:$0x1f]
        %597 = vrot.lane.b32.xlu0 %v595, 64
        %v598 = vpop.permute.xlu0 %597
        %600 = vst.msk [vmem:[#allocation3 + $0x14] sm:$0x1f] %vm531, %v598
        %v601 = vld [vmem:[#allocation2 + $0x8] sm:$0x1f]
        %603 = vrot.lane.b32.xlu0 %v601, 112
        %v604 = vpop.permute.xlu0 %603
        %606 = vst.msk [vmem:[#allocation3 + $0x2d] sm:$0x1f] %vm531, %v604
        %v607 = vld [vmem:[#allocation2 + $0x8] sm:$0x1f]
        %609 = vrot.lane.b32.xlu0 %v607, 32
        %v610 = vpop.permute.xlu0 %609
        %612 = vst.msk [vmem:[#allocation3 + $0x46] sm:$0x1f] %vm531, %v610
        %v613 = vld [vmem:[#allocation3] sm:$0xff]
        %v614 = vld [vmem:[#allocation3 + $0x8] sm:$0xff]
        %v615 = vld [vmem:[#allocation3 + $0x10] sm:$0xff]
        %v616 = vld [vmem:[#allocation3 + $0x18] sm:$0x1]
        %v617 = vld [vmem:[#allocation3 + $0x19] sm:$0xff]
        %v618 = vld [vmem:[#allocation3 + $0x21] sm:$0xff]
        %v619 = vld [vmem:[#allocation3 + $0x29] sm:$0xff]
        %v620 = vld [vmem:[#allocation3 + $0x31] sm:$0x1]
        %v621 = vld [vmem:[#allocation3 + $0x32] sm:$0xff]
        %v622 = vld [vmem:[#allocation3 + $0x3a] sm:$0xff]
        %v623 = vld [vmem:[#allocation3 + $0x42] sm:$0xff]
        %v624 = vld [vmem:[#allocation3 + $0x4a] sm:$0x1]
        %vm625 = vcmask 130048
        %v627 = vsel %vm625, %v613, 0
        %v630 = vsel %vm625, %v614, 0
        %v633 = vsel %vm625, %v615, 0
        %v636 = vsel %vm625, %v616, 0
        %v639 = vsel %vm625, %v617, 0
        %v642 = vsel %vm625, %v618, 0
        %v645 = vsel %vm625, %v619, 0
        %v648 = vsel %vm625, %v620, 0
        %650 = vmatpush.xpose.msra.mxu0 0.0
        %651 = vmatpush.xpose.msra.mxu0 0.0
        %652 = vmatpush.xpose.msra.mxu0 0.0
        %653 = vmatpush.xpose.msra.mxu0 0.0
        %654 = vmatpush.xpose.msra.mxu0 0.0
        %655 = vmatpush.xpose.msra.mxu0 0.0
        %656 = vmatpush.xpose.msra.mxu0 0.0
        %657 = vmatpush.xpose.msra.mxu0 0.0
        %658 = vmatpush.xpose.msra.mxu0 0.0
        %659 = vmatpush.xpose.msra.mxu0 0.0
        %660 = vmatpush.xpose.msra.mxu0 0.0
        %661 = vmatpush.xpose.msra.mxu0 0.0
        %662 = vmatpush.xpose.msra.mxu0 %v648
        %663 = vmatpush.xpose.msra.mxu0 %v645
        %664 = vmatpush.xpose.msra.mxu0 %v642
        %665 = vmatpush.xpose.msra.mxu0 %v639
        %666 = vmatmul.f32.gmra.mxu0 %v627
        %v667 = vpop.f32.mrf.mxu0
        %v668 = vadd.f32 0.0, %v667
        %669 = vmatmul.f32.gmra.mxu0 %v630
        %v670 = vpop.f32.mrf.mxu0
        %v671 = vadd.f32 0.0, %v670
        %672 = vmatmul.f32.gmra.mxu0 %v633
        %v673 = vpop.f32.mrf.mxu0
        %v674 = vadd.f32 0.0, %v673
        %675 = vmatmul.f32.gmra.mxu0 %v636
        %v676 = vpop.f32.mrf.mxu0
        %v677 = vadd.f32 0.0, %v676
        %678 = vdwg.mxu0
        %v679 = vmul.f32 %v668, 0.25
        %v680 = vmul.f32 %v671, 0.25
        %v681 = vmul.f32 %v674, 0.25
        %v682 = vmul.f32 %v677, 0.25
        %vm687 = vcmask 1040384
        %v688 = vrot.slane %v415, 7
        %v689 = vrot.slane %v416, 7
        %v690 = vsel %vm687, %v688, %v689
        %v691 = vrot.slane %v417, 7
        %v692 = vsel %vm687, %v689, %v691
        %v693 = vrot.slane %v418, 7
        %v694 = vsel %vm687, %v691, %v693
        %v699 = vadd.f32 %v679, %v690
        %v700 = vadd.f32 %v680, %v692
        %v701 = vadd.f32 %v681, %v694
        %v702 = vadd.f32 %v682, %v693
        %vm703 = vcmask 203776
        %v704 = vsel %vm703, %v699, -inf
        %705 = vmax.xlane.f32.xlu0 %v704
        %v706 = vpop.xlane.xlu0 %705
        %v707 = vsel %vm703, %v700, -inf
        %708 = vmax.xlane.f32.xlu0 %v707
        %v709 = vpop.xlane.xlu0 %708
        %v710 = vsel %vm703, %v701, -inf
        %711 = vmax.xlane.f32.xlu0 %v710
        %v712 = vpop.xlane.xlu0 %711
        %vm713 = vcmask 196608
        %v714 = vsel %vm713, %v702, -inf
        %715 = vmax.xlane.f32.xlu0 %v714
        %v716 = vpop.xlane.xlu0 %715
        %v717 = vsub.f32 %v699, %v706
        %v718 = vsub.f32 %v700, %v709
        %v719 = vsub.f32 %v701, %v712
        %v720 = vsub.f32 %v702, %v716
        %v721 = vmul.f32 %v717, 1.442695
        %v722 = vpow.pop %v721
        %v723 = vmul.f32 %v718, 1.442695
        %v724 = vpow.pop %v723
        %v725 = vmul.f32 %v719, 1.442695
        %v726 = vpow.pop %v725
        %v727 = vmul.f32 %v720, 1.442695
        %v728 = vpow.pop %v727
        %v729 = vsel %vm703, %v722, 0.0
        %730 = vadd.xlane.f32.xlu0 %v729
        %v731 = vpop.xlane.xlu0 %730
        %v732 = vsel %vm703, %v724, 0.0
        %733 = vadd.xlane.f32.xlu0 %v732
        %v734 = vpop.xlane.xlu0 %733
        %v735 = vsel %vm703, %v726, 0.0
        %736 = vadd.xlane.f32.xlu0 %v735
        %v737 = vpop.xlane.xlu0 %736
        %v738 = vsel %vm713, %v728, 0.0
        %739 = vadd.xlane.f32.xlu0 %v738
        %v740 = vpop.xlane.xlu0 %739
        %v741 = vrcp.pop %v731
        %v742 = vmul.f32 %v731, %v741
        %v743 = vsub.f32 1.0, %v742
        %v744 = vmul.f32 %v741, %v743
        %v745 = vadd.f32 %v741, %v744
        %vm746 = vweird.f32 %v731
        %vm747 = vweird.f32 %v741
        %vm748 = vmor %vm746, %vm747
        %v749 = vsel %vm748, %v741, %v745
        %v750 = vand.u32 2147483647, %v731
        %vm751 = vcmp.eq.f32.partialorder %v750, 8.507059e+37
        %v752 = vand.u32 %v731, 2147483648
        %v753 = vor.u32 1.1754944e-38, %v752
        %v754 = vsel %vm751, %v753, %v749
        %v755 = vmul.f32 %v722, %v754
        %v756 = vrcp.pop %v734
        %v757 = vmul.f32 %v734, %v756
        %v758 = vsub.f32 1.0, %v757
        %v759 = vmul.f32 %v756, %v758
        %v760 = vadd.f32 %v756, %v759
        %vm761 = vweird.f32 %v734
        %vm762 = vweird.f32 %v756
        %vm763 = vmor %vm761, %vm762
        %v764 = vsel %vm763, %v756, %v760
        %v765 = vand.u32 2147483647, %v734
        %vm766 = vcmp.eq.f32.partialorder %v765, 8.507059e+37
        %v767 = vand.u32 %v734, 2147483648
        %v768 = vor.u32 1.1754944e-38, %v767
        %v769 = vsel %vm766, %v768, %v764
        %v770 = vmul.f32 %v724, %v769
        %v771 = vrcp.pop %v737
        %v772 = vmul.f32 %v737, %v771
        %v773 = vsub.f32 1.0, %v772
        %v774 = vmul.f32 %v771, %v773
        %v775 = vadd.f32 %v771, %v774
        %vm776 = vweird.f32 %v737
        %vm777 = vweird.f32 %v771
        %vm778 = vmor %vm776, %vm777
        %v779 = vsel %vm778, %v771, %v775
        %v780 = vand.u32 2147483647, %v737
        %vm781 = vcmp.eq.f32.partialorder %v780, 8.507059e+37
        %v782 = vand.u32 %v737, 2147483648
        %v783 = vor.u32 1.1754944e-38, %v782
        %v784 = vsel %vm781, %v783, %v779
        %v785 = vmul.f32 %v726, %v784
        %v786 = vrcp.pop %v740
        %v787 = vmul.f32 %v740, %v786
        %v788 = vsub.f32 1.0, %v787
        %v789 = vmul.f32 %v786, %v788
        %v790 = vadd.f32 %v786, %v789
        %vm791 = vweird.f32 %v740
        %vm792 = vweird.f32 %v786
        %vm793 = vmor %vm791, %vm792
        %v794 = vsel %vm793, %v786, %v790
        %v795 = vand.u32 2147483647, %v740
        %vm796 = vcmp.eq.f32.partialorder %v795, 8.507059e+37
        %v797 = vand.u32 %v740, 2147483648
        %v798 = vor.u32 1.1754944e-38, %v797
        %v799 = vsel %vm796, %v798, %v794
        %v800 = vmul.f32 %v728, %v799
        %v802 = vsel %vm703, %v755, 0
        %v805 = vsel %vm703, %v770, 0
        %v808 = vsel %vm703, %v785, 0
        %v811 = vsel %vm703, %v800, 0
        %v814 = vsel %vm687, %v624, 0
        %816 = vmatpush.msra.mxu0 0.0
        %817 = vmatpush.msra.mxu0 0.0
        %818 = vmatpush.msra.mxu0 0.0
        %819 = vmatpush.msra.mxu0 0.0
        %820 = vmatpush.msra.mxu0 0.0
        %821 = vmatpush.msra.mxu0 0.0
        %822 = vmatpush.msra.mxu0 0.0
        %823 = vmatpush.msra.mxu0 0.0
        %824 = vmatpush.msra.mxu0 0.0
        %825 = vmatpush.msra.mxu0 0.0
        %826 = vmatpush.msra.mxu0 0.0
        %827 = vmatpush.msra.mxu0 0.0
        %828 = vmatpush.msra.mxu0 %v814
        %829 = vmatpush.msra.mxu0 %v623
        %830 = vmatpush.msra.mxu0 %v622
        %831 = vmatpush.msra.mxu0 %v621
        %832 = vmatmul.f32.gmra.mxu0 %v802
        %v833 = vpop.f32.mrf.mxu0
        %v834 = vadd.f32 0.0, %v833
        %835 = vmatmul.f32.gmra.mxu0 %v805
        %v836 = vpop.f32.mrf.mxu0
        %v837 = vadd.f32 0.0, %v836
        %838 = vmatmul.f32.gmra.mxu0 %v808
        %v839 = vpop.f32.mrf.mxu0
        %v840 = vadd.f32 0.0, %v839
        %841 = vmatmul.f32.gmra.mxu0 %v811
        %v842 = vpop.f32.mrf.mxu0
        %v843 = vadd.f32 0.0, %v842
        %844 = vdwg.mxu0
        %845 = vst.msk [vmem:[#allocation4] sm:$0xff] %vm625, %v834
        %846 = vst.msk [vmem:[#allocation4 + $0x8] sm:$0xff] %vm625, %v837
        %847 = vst.msk [vmem:[#allocation4 + $0x10] sm:$0xff] %vm625, %v840
        %vm848 = vcmask 122880
        %849 = vst.msk [vmem:[#allocation4 + $0x18] sm:$0x1] %vm848, %v843
        %v850 = vld [vmem:[#allocation4] sm:$0x1f]
        %851 = vst.msk [vmem:[#allocation5] sm:$0x1f] %vm531, %v850
        %v852 = vld [vmem:[#allocation4 + $0x5] sm:$0x1f]
        %854 = vrot.lane.b32.xlu0 %v852, 16
        %v855 = vpop.permute.xlu0 %854
        %vm857 = vcmask 258176
        %858 = vst.msk [vmem:[#allocation5] sm:$0x1f] %vm857, %v855
        %v859 = vld [vmem:[#allocation4 + $0xa] sm:$0x1f]
        %861 = vrot.lane.b32.xlu0 %v859, 32
        %v862 = vpop.permute.xlu0 %861
        %vm864 = vcmask 389376
        %865 = vst.msk [vmem:[#allocation5] sm:$0x1f] %vm864, %v862
        %v866 = vld [vmem:[#allocation4 + $0xf] sm:$0x1f]
        %868 = vrot.lane.b32.xlu0 %v866, 48
        %v869 = vpop.permute.xlu0 %868
        %vm871 = vcmask 520576
        %872 = vst.msk [vmem:[#allocation5] sm:$0x1f] %vm871, %v869
        %v873 = vld [vmem:[#allocation4 + $0x14] sm:$0x1f]
        %875 = vrot.lane.b32.xlu0 %v873, 64
        %v876 = vpop.permute.xlu0 %875
        %vm878 = vcmask 651776
        %879 = vst.msk [vmem:[#allocation5] sm:$0x1f] %vm878, %v876
        %v880 = vld [vmem:[#allocation5] sm:$0x1f]
        %v881 = vld [vmem:[%s5] sm:$0xff]
        %v882 = vld [vmem:[%s5 + $0x8] sm:$0xff]
        %v883 = vld [vmem:[%s5 + $0x10] sm:$0xff]
        %v884 = vld [vmem:[%s5 + $0x18] sm:$0xff]
        %v885 = vld [vmem:[%s5 + $0x20] sm:$0xff]
        %v886 = vld [vmem:[%s5 + $0x28] sm:$0xff]
        %v887 = vld [vmem:[%s5 + $0x30] sm:$0xff]
        %v888 = vld [vmem:[%s5 + $0x38] sm:$0xff]
        %v889 = vld [vmem:[%s5 + $0x40] sm:$0xff]
        %v890 = vld [vmem:[%s5 + $0x48] sm:$0xff]
        %v891 = vld [vmem:[%s3 + $0x4] sm:$0x1]
        %v892 = vperm.slane %v891, 0
        %vm893 = vcmask 654336
        %v895 = vsel %vm893, %v880, 0
        %897 = vmatpush.msra.mxu0 0.0
        %898 = vmatpush.msra.mxu0 0.0
        %899 = vmatpush.msra.mxu0 0.0
        %900 = vmatpush.msra.mxu0 0.0
        %901 = vmatpush.msra.mxu0 0.0
        %902 = vmatpush.msra.mxu0 0.0
        %903 = vmatpush.msra.mxu0 %v890
        %904 = vmatpush.msra.mxu0 %v889
        %905 = vmatpush.msra.mxu0 %v888
        %906 = vmatpush.msra.mxu0 %v887
        %907 = vmatpush.msra.mxu0 %v886
        %908 = vmatpush.msra.mxu0 %v885
        %909 = vmatpush.msra.mxu0 %v884
        %910 = vmatpush.msra.mxu0 %v883
        %911 = vmatpush.msra.mxu0 %v882
        %912 = vmatpush.msra.mxu0 %v881
        %913 = vmatmul.f32.gmra.mxu0 %v895
        %v914 = vpop.f32.mrf.mxu0
        %v915 = vadd.f32 %v892, %v914
        %916 = vdwg.mxu0
        %v917 = vadd.f32 %v915, %v414
        %v918 = vld [vmem:[%s3 + $0x5] sm:$0x1]
        %v919 = vld [vmem:[%s3 + $0x6] sm:$0x1]
        %v920 = vsel %vm377, %v917, 0.0
        %921 = vadd.xlane.f32.xlu0 %v920
        %v922 = vpop.xlane.xlu0 %921
        %v923 = vmul.f32 %v922, %v387
        %v924 = vsub.f32 %v917, %v923
        %v925 = vmul.f32 %v924, %v924
        %v926 = vsel %vm377, %v925, 0.0
        %927 = vadd.xlane.f32.xlu0 %v926
        %v928 = vpop.xlane.xlu0 %927
        %v929 = vmul.f32 %v928, %v387
        %v930 = vadd.f32 %v929, 1e-05
        %v931 = vrsqrt.pop %v930
        %v932 = vmul.f32 %v931, %v930
        %v933 = vmul.f32 %v932, %v931
        %v934 = vmul.f32 0.5, %v933
        %v935 = vsub.f32 1.5, %v934
        %v936 = vmul.f32 %v931, %v935
        %vm937 = vweird.f32 %v930
        %vm938 = vweird.f32 %v931
        %vm939 = vmor %vm937, %vm938
        %v940 = vsel %vm939, %v931, %v936
        %v941 = vmul.f32 %v924, %v940
        %v942 = vperm.slane %v918, 0
        %v943 = vmul.f32 %v941, %v942
        %v944 = vperm.slane %v919, 0
        %v945 = vadd.f32 %v943, %v944
        %v946 = vld [vmem:[%s4 + $0x8] sm:$0xff]
        %v947 = vld [vmem:[%s4 + $0x10] sm:$0xff]
        %v948 = vld [vmem:[%s4 + $0x20] sm:$0xff]
        %v949 = vld [vmem:[%s4 + $0x28] sm:$0xff]
        %v950 = vld [vmem:[%s4 + $0x38] sm:$0xff]
        %v951 = vld [vmem:[%s4 + $0x40] sm:$0xff]
        %v952 = vld [vmem:[%s4 + $0x50] sm:$0xff]
        %v953 = vld [vmem:[%s4 + $0x58] sm:$0xff]
        %v954 = vld [vmem:[%s3 + $0x8] sm:$0x1]
        %v955 = vperm.slane %v954, 0
        %964 = vrot.lane.b32.xlu0 %v946, 16
        %v965 = vpop.permute.xlu0 %964
        %966 = vrot.lane.b32.xlu0 %v947, 16
        %v967 = vpop.permute.xlu0 %966
        %968 = vrot.lane.b32.xlu0 %v948, 16
        %v969 = vpop.permute.xlu0 %968
        %970 = vrot.lane.b32.xlu0 %v949, 16
        %v971 = vpop.permute.xlu0 %970
        %972 = vrot.lane.b32.xlu0 %v950, 16
        %v973 = vpop.permute.xlu0 %972
        %974 = vrot.lane.b32.xlu0 %v951, 16
        %v975 = vpop.permute.xlu0 %974
        %976 = vrot.lane.b32.xlu0 %v952, 16
        %v977 = vpop.permute.xlu0 %976
        %978 = vrot.lane.b32.xlu0 %v953, 16
        %v979 = vpop.permute.xlu0 %978
        %v980 = vsel %vm625, %v965, %v967
        %v981 = vsel %vm625, %v969, %v971
        %v982 = vsel %vm625, %v973, %v975
        %v983 = vsel %vm625, %v977, %v979
        %v989 = vsel %vm483, %v945, 0
        %991 = vmatpush.msra.mxu0 0.0
        %992 = vmatpush.msra.mxu0 0.0
        %993 = vmatpush.msra.mxu0 0.0
        %994 = vmatpush.msra.mxu0 0.0
        %995 = vmatpush.msra.mxu0 0.0
        %996 = vmatpush.msra.mxu0 0.0
        %997 = vmatpush.msra.mxu0 0.0
        %998 = vmatpush.msra.mxu0 0.0
        %999 = vmatpush.msra.mxu0 0.0
        %1000 = vmatpush.msra.mxu0 0.0
        %1001 = vmatpush.msra.mxu0 0.0
        %1002 = vmatpush.msra.mxu0 0.0
        %1003 = vmatpush.msra.mxu0 %v983
        %1004 = vmatpush.msra.mxu0 %v982
        %1005 = vmatpush.msra.mxu0 %v981
        %1006 = vmatpush.msra.mxu0 %v980
        %1007 = vmatmul.f32.gmra.mxu0 %v989
        %v1008 = vpop.f32.mrf.mxu0
        %v1009 = vadd.f32 %v955, %v1008
        %1010 = vdwg.mxu0
        %v1011 = vmul.f32 %v1009, 0.5
        %v1012 = vmul.f32 %v1009, 0.70710677
        %v1013 = vmul.f32 %v1012, %v1012
        %v1014 = vmin.f32 16.0, %v1013
        %v1015 = vmul.f32 %v1014, 2.1237322e-06
        %v1016 = vadd.f32 %v1015, 0.00028619796
        %v1017 = vmul.f32 %v1014, %v1016
        %v1018 = vadd.f32 %v1017, 0.0036580483
        %v1019 = vmul.f32 %v1014, %v1018
        %v1020 = vadd.f32 %v1019, 0.05243302
        %v1021 = vmul.f32 %v1014, %v1020
        %v1022 = vadd.f32 %v1021, 0.18741608
        %v1023 = vmul.f32 %v1014, %v1022
        %v1024 = vadd.f32 %v1023, 1.1283791
        %v1025 = vmul.f32 %v1012, %v1024
        %v1026 = vmul.f32 %v1014, 3.8918573e-05
        %v1027 = vadd.f32 %v1026, 0.001143296
        %v1028 = vmul.f32 %v1014, %v1027
        %v1029 = vadd.f32 %v1028, 0.014752088
        %v1030 = vmul.f32 %v1014, %v1029
        %v1031 = vadd.f32 %v1030, 0.112945676
        %v1032 = vmul.f32 %v1014, %v1031
        %v1033 = vadd.f32 %v1032, 0.4994258
        %v1034 = vmul.f32 %v1014, %v1033
        %v1035 = vadd.f32 %v1034, 1.0
        %v1036 = vrcp.pop %v1035
        %v1037 = vmul.f32 %v1035, %v1036
        %v1038 = vsub.f32 1.0, %v1037
        %v1039 = vmul.f32 %v1036, %v1038
        %v1040 = vadd.f32 %v1036, %v1039
        %vm1041 = vweird.f32 %v1035
        %vm1042 = vweird.f32 %v1036
        %vm1043 = vmor %vm1041, %vm1042
        %v1044 = vsel %vm1043, %v1036, %v1040
        %v1045 = vand.u32 2147483647, %v1035
        %vm1046 = vcmp.eq.f32.partialorder %v1045, 8.507059e+37
        %v1047 = vand.u32 %v1035, 2147483648
        %v1048 = vor.u32 1.1754944e-38, %v1047
        %v1049 = vsel %vm1046, %v1048, %v1044
        %v1050 = vmul.f32 %v1025, %v1049
        %v1051 = vmin.f32 %v1050, 1.0
        %v1052 = vmax.f32 %v1051, -1.0
        %v1053 = vadd.f32 %v1052, 1.0
        %v1054 = vmul.f32 %v1011, %v1053
        %v1055 = vld [vmem:[%s5 + $0x50] sm:$0xff]
        %v1056 = vld [vmem:[%s5 + $0x58] sm:$0xff]
        %v1057 = vld [vmem:[%s5 + $0x60] sm:$0xff]
        %v1058 = vld [vmem:[%s5 + $0x68] sm:$0xff]
        %v1059 = vld [vmem:[%s5 + $0x70] sm:$0xff]
        %v1060 = vld [vmem:[%s5 + $0x78] sm:$0xff]
        %v1061 = vld [vmem:[%s5 + $0x80] sm:$0xff]
        %v1062 = vld [vmem:[%s5 + $0x88] sm:$0xff]
        %v1063 = vld [vmem:[%s3 + $0x7] sm:$0x1]
        %v1064 = vperm.slane %v1063, 0
        %v1066 = vsel %vm331, %v1054, 0
        %1068 = vmatpush.msra.mxu0 0.0
        %1069 = vmatpush.msra.mxu0 0.0
        %1070 = vmatpush.msra.mxu0 0.0
        %1071 = vmatpush.msra.mxu0 0.0
        %1072 = vmatpush.msra.mxu0 0.0
        %1073 = vmatpush.msra.mxu0 0.0
        %1074 = vmatpush.msra.mxu0 0.0
        %1075 = vmatpush.msra.mxu0 0.0
        %1076 = vmatpush.msra.mxu0 %v1062
        %1077 = vmatpush.msra.mxu0 %v1061
        %1078 = vmatpush.msra.mxu0 %v1060
        %1079 = vmatpush.msra.mxu0 %v1059
        %1080 = vmatpush.msra.mxu0 %v1058
        %1081 = vmatpush.msra.mxu0 %v1057
        %1082 = vmatpush.msra.mxu0 %v1056
        %1083 = vmatpush.msra.mxu0 %v1055
        %1084 = vmatmul.f32.gmra.mxu0 %v1066
        %v1085 = vpop.f32.mrf.mxu0
        %v1086 = vadd.f32 %v1064, %v1085
        %1087 = vdwg.mxu0
        %v1088 = vadd.f32 %v1086, %v917
        %s1089 = scalar_lea.vmem %s3, 16
        %v1090 = vld [vmem:[%s1089] sm:$0x1]
        %v1091 = vld [vmem:[%s1089 + $0x1] sm:$0x1]
        %v1092 = vsel %vm377, %v1088, 0.0
        %1093 = vadd.xlane.f32.xlu0 %v1092
        %v1094 = vpop.xlane.xlu0 %1093
        %v1095 = vmul.f32 %v1094, %v387
        %v1096 = vsub.f32 %v1088, %v1095
        %v1097 = vmul.f32 %v1096, %v1096
        %v1098 = vsel %vm377, %v1097, 0.0
        %1099 = vadd.xlane.f32.xlu0 %v1098
        %v1100 = vpop.xlane.xlu0 %1099
        %v1101 = vmul.f32 %v1100, %v387
        %v1102 = vadd.f32 %v1101, 1e-05
        %v1103 = vrsqrt.pop %v1102
        %v1104 = vmul.f32 %v1103, %v1102
        %v1105 = vmul.f32 %v1104, %v1103
        %v1106 = vmul.f32 0.5, %v1105
        %v1107 = vsub.f32 1.5, %v1106
        %v1108 = vmul.f32 %v1103, %v1107
        %vm1109 = vweird.f32 %v1102
        %vm1110 = vweird.f32 %v1103
        %vm1111 = vmor %vm1109, %vm1110
        %v1112 = vsel %vm1111, %v1103, %v1108
        %v1113 = vmul.f32 %v1096, %v1112
        %v1114 = vperm.slane %v1090, 0
        %v1115 = vmul.f32 %v1113, %v1114
        %v1116 = vperm.slane %v1091, 0
        %v1117 = vadd.f32 %v1115, %v1116
        %v1118 = vld [vmem:[%s1089 + $0x2] sm:$0x1]
        %v1119 = vld [vmem:[%s1089 + $0x3] sm:$0x1]
        %v1120 = vsel %vm377, %v1117, 0.0
        %1121 = vadd.xlane.f32.xlu0 %v1120
        %v1122 = vpop.xlane.xlu0 %1121
        %v1123 = vmul.f32 %v1122, %v387
        %v1124 = vsub.f32 %v1117, %v1123
        %v1125 = vmul.f32 %v1124, %v1124
        %v1126 = vsel %vm377, %v1125, 0.0
        %1127 = vadd.xlane.f32.xlu0 %v1126
        %v1128 = vpop.xlane.xlu0 %1127
        %v1129 = vmul.f32 %v1128, %v387
        %v1130 = vadd.f32 %v1129, 1e-05
        %v1131 = vrsqrt.pop %v1130
        %v1132 = vmul.f32 %v1131, %v1130
        %v1133 = vmul.f32 %v1132, %v1131
        %v1134 = vmul.f32 0.5, %v1133
        %v1135 = vsub.f32 1.5, %v1134
        %v1136 = vmul.f32 %v1131, %v1135
        %vm1137 = vweird.f32 %v1130
        %vm1138 = vweird.f32 %v1131
        %vm1139 = vmor %vm1137, %vm1138
        %v1140 = vsel %vm1139, %v1131, %v1136
        %v1141 = vmul.f32 %v1124, %v1140
        %v1142 = vperm.slane %v1118, 0
        %v1143 = vmul.f32 %v1141, %v1142
        %v1144 = vperm.slane %v1119, 0
        %v1145 = vadd.f32 %v1143, %v1144
        %s1146 = scalar_lea.vmem %s4, 96
        %v1147 = vld [vmem:[%s1146] sm:$0xff]
        %v1148 = vld [vmem:[%s1146 + $0x8] sm:$0xff]
        %v1149 = vld [vmem:[%s1146 + $0x18] sm:$0xff]
        %v1150 = vld [vmem:[%s1146 + $0x20] sm:$0xff]
        %v1151 = vld [vmem:[%s1146 + $0x30] sm:$0xff]
        %v1152 = vld [vmem:[%s1146 + $0x38] sm:$0xff]
        %v1153 = vld [vmem:[%s1146 + $0x48] sm:$0xff]
        %v1154 = vld [vmem:[%s1146 + $0x50] sm:$0xff]
        %v1156 = vsel %vm483, %v1145, 0
        %1158 = vmatpush.msra.mxu0 0.0
        %1159 = vmatpush.msra.mxu0 0.0
        %1160 = vmatpush.msra.mxu0 0.0
        %1161 = vmatpush.msra.mxu0 0.0
        %1162 = vmatpush.msra.mxu0 0.0
        %1163 = vmatpush.msra.mxu0 0.0
        %1164 = vmatpush.msra.mxu0 0.0
        %1165 = vmatpush.msra.mxu0 0.0
        %1166 = vmatpush.msra.mxu0 0.0
        %1167 = vmatpush.msra.mxu0 0.0
        %1168 = vmatpush.msra.mxu0 0.0
        %1169 = vmatpush.msra.mxu0 0.0
        %1170 = vmatpush.msra.mxu0 %v1153
        %1171 = vmatpush.msra.mxu0 %v1151
        %1172 = vmatpush.msra.mxu0 %v1149
        %1173 = vmatpush.msra.mxu0 %v1147
        %1174 = vmatmul.f32.gmra.mxu0 %v1156
        %v1175 = vpop.f32.mrf.mxu0
        %v1176 = vadd.f32 0.0, %v1175
        %1177 = vdwg.mxu0
        %1178 = vmatpush.msra.mxu0 0.0
        %1179 = vmatpush.msra.mxu0 0.0
        %1180 = vmatpush.msra.mxu0 0.0
        %1181 = vmatpush.msra.mxu0 0.0
        %1182 = vmatpush.msra.mxu0 0.0
        %1183 = vmatpush.msra.mxu0 0.0
        %1184 = vmatpush.msra.mxu0 0.0
        %1185 = vmatpush.msra.mxu0 0.0
        %1186 = vmatpush.msra.mxu0 0.0
        %1187 = vmatpush.msra.mxu0 0.0
        %1188 = vmatpush.msra.mxu0 0.0
        %1189 = vmatpush.msra.mxu0 0.0
        %1190 = vmatpush.msra.mxu0 %v1154
        %1191 = vmatpush.msra.mxu0 %v1152
        %1192 = vmatpush.msra.mxu0 %v1150
        %1193 = vmatpush.msra.mxu0 %v1148
        %1194 = vmatmul.f32.gmra.mxu0 %v1156
        %v1195 = vpop.f32.mrf.mxu0
        %v1196 = vadd.f32 0.0, %v1195
        %1197 = vdwg.mxu0
        %1198 = vst [vmem:[#allocation2] sm:$0x1f] %v1176
        %1199 = vst.msk [vmem:[#allocation2 + $0x8] sm:$0x1f] %vm528, %v1196
        %v1200 = vld [vmem:[#allocation2] sm:$0x1f]
        %1201 = vst.msk [vmem:[#allocation3] sm:$0x1f] %vm531, %v1200
        %v1202 = vld [vmem:[#allocation2] sm:$0x1f]
        %1204 = vrot.lane.b32.xlu0 %v1202, 48
        %v1205 = vpop.permute.xlu0 %1204
        %1207 = vst.msk [vmem:[#allocation3 + $0x19] sm:$0x1f] %vm531, %v1205
        %v1208 = vld [vmem:[#allocation2 + $0x8] sm:$0x1f]
        %1210 = vrot.lane.b32.xlu0 %v1208, 96
        %v1211 = vpop.permute.xlu0 %1210
        %1213 = vst.msk [vmem:[#allocation3 + $0x32] sm:$0x1f] %vm531, %v1211
        %v1214 = vld [vmem:[#allocation2] sm:$0x1f]
        %1216 = vrot.lane.b32.xlu0 %v1214, 112
        %v1217 = vpop.permute.xlu0 %1216
        %1219 = vst.msk [vmem:[#allocation3 + $0x5] sm:$0x1f] %vm531, %v1217
        %v1220 = vld [vmem:[#allocation2] sm:$0x1f]
        %1222 = vrot.lane.b32.xlu0 %v1220, 32
        %v1223 = vpop.permute.xlu0 %1222
        %1225 = vst.msk [vmem:[#allocation3 + $0x1e] sm:$0x1f] %vm531, %v1223
        %v1226 = vld [vmem:[#allocation2 + $0x8] sm:$0x1f]
        %1228 = vrot.lane.b32.xlu0 %v1226, 80
        %v1229 = vpop.permute.xlu0 %1228
        %1231 = vst.msk [vmem:[#allocation3 + $0x37] sm:$0x1f] %vm531, %v1229
        %v1232 = vld [vmem:[#allocation2] sm:$0x1f]
        %1234 = vrot.lane.b32.xlu0 %v1232, 96
        %v1235 = vpop.permute.xlu0 %1234
        %1237 = vst.msk [vmem:[#allocation3 + $0xa] sm:$0x1f] %vm531, %v1235
        %v1238 = vld [vmem:[#allocation2] sm:$0x1f]
        %1240 = vrot.lane.b32.xlu0 %v1238, 16
        %v1241 = vpop.permute.xlu0 %1240
        %1243 = vst.msk [vmem:[#allocation3 + $0x23] sm:$0x1f] %vm531, %v1241
        %v1244 = vld [vmem:[#allocation2 + $0x8] sm:$0x1f]
        %1246 = vrot.lane.b32.xlu0 %v1244, 64
        %v1247 = vpop.permute.xlu0 %1246
        %1249 = vst.msk [vmem:[#allocation3 + $0x3c] sm:$0x1f] %vm531, %v1247
        %v1250 = vld [vmem:[#allocation2] sm:$0x1f]
        %1252 = vrot.lane.b32.xlu0 %v1250, 80
        %v1253 = vpop.permute.xlu0 %1252
        %1255 = vst.msk [vmem:[#allocation3 + $0xf] sm:$0x1f] %vm531, %v1253
        %v1256 = vld [vmem:[#allocation2 + $0x8] sm:$0x1f]
        %1257 = vst.msk [vmem:[#allocation3 + $0x28] sm:$0x1f] %vm531, %v1256
        %v1258 = vld [vmem:[#allocation2 + $0x8] sm:$0x1f]
        %1260 = vrot.lane.b32.xlu0 %v1258, 48
        %v1261 = vpop.permute.xlu0 %1260
        %1263 = vst.msk [vmem:[#allocation3 + $0x41] sm:$0x1f] %vm531, %v1261
        %v1264 = vld [vmem:[#allocation2] sm:$0x1f]
        %1266 = vrot.lane.b32.xlu0 %v1264, 64
        %v1267 = vpop.permute.xlu0 %1266
        %1269 = vst.msk [vmem:[#allocation3 + $0x14] sm:$0x1f] %vm531, %v1267
        %v1270 = vld [vmem:[#allocation2 + $0x8] sm:$0x1f]
        %1272 = vrot.lane.b32.xlu0 %v1270, 112
        %v1273 = vpop.permute.xlu0 %1272
        %1275 = vst.msk [vmem:[#allocation3 + $0x2d] sm:$0x1f] %vm531, %v1273
        %v1276 = vld [vmem:[#allocation2 + $0x8] sm:$0x1f]
        %1278 = vrot.lane.b32.xlu0 %v1276, 32
        %v1279 = vpop.permute.xlu0 %1278
        %1281 = vst.msk [vmem:[#allocation3 + $0x46] sm:$0x1f] %vm531, %v1279
        %v1282 = vld [vmem:[#allocation3] sm:$0xff]
        %v1283 = vld [vmem:[#allocation3 + $0x8] sm:$0xff]
        %v1284 = vld [vmem:[#allocation3 + $0x10] sm:$0xff]
        %v1285 = vld [vmem:[#allocation3 + $0x18] sm:$0x1]
        %v1286 = vld [vmem:[#allocation3 + $0x19] sm:$0xff]
        %v1287 = vld [vmem:[#allocation3 + $0x21] sm:$0xff]
        %v1288 = vld [vmem:[#allocation3 + $0x29] sm:$0xff]
        %v1289 = vld [vmem:[#allocation3 + $0x31] sm:$0x1]
        %v1290 = vld [vmem:[#allocation3 + $0x32] sm:$0xff]
        %v1291 = vld [vmem:[#allocation3 + $0x3a] sm:$0xff]
        %v1292 = vld [vmem:[#allocation3 + $0x42] sm:$0xff]
        %v1293 = vld [vmem:[#allocation3 + $0x4a] sm:$0x1]
        %v1295 = vsel %vm625, %v1282, 0
        %v1298 = vsel %vm625, %v1283, 0
        %v1301 = vsel %vm625, %v1284, 0
        %v1304 = vsel %vm625, %v1285, 0
        %v1307 = vsel %vm625, %v1286, 0
        %v1310 = vsel %vm625, %v1287, 0
        %v1313 = vsel %vm625, %v1288, 0
        %v1316 = vsel %vm625, %v1289, 0
        %1318 = vmatpush.xpose.msra.mxu0 0.0
        %1319 = vmatpush.xpose.msra.mxu0 0.0
        %1320 = vmatpush.xpose.msra.mxu0 0.0
        %1321 = vmatpush.xpose.msra.mxu0 0.0
        %1322 = vmatpush.xpose.msra.mxu0 0.0
        %1323 = vmatpush.xpose.msra.mxu0 0.0
        %1324 = vmatpush.xpose.msra.mxu0 0.0
        %1325 = vmatpush.xpose.msra.mxu0 0.0
        %1326 = vmatpush.xpose.msra.mxu0 0.0
        %1327 = vmatpush.xpose.msra.mxu0 0.0
        %1328 = vmatpush.xpose.msra.mxu0 0.0
        %1329 = vmatpush.xpose.msra.mxu0 0.0
        %1330 = vmatpush.xpose.msra.mxu0 %v1316
        %1331 = vmatpush.xpose.msra.mxu0 %v1313
        %1332 = vmatpush.xpose.msra.mxu0 %v1310
        %1333 = vmatpush.xpose.msra.mxu0 %v1307
        %1334 = vmatmul.f32.gmra.mxu0 %v1295
        %v1335 = vpop.f32.mrf.mxu0
        %v1336 = vadd.f32 0.0, %v1335
        %1337 = vmatmul.f32.gmra.mxu0 %v1298
        %v1338 = vpop.f32.mrf.mxu0
        %v1339 = vadd.f32 0.0, %v1338
        %1340 = vmatmul.f32.gmra.mxu0 %v1301
        %v1341 = vpop.f32.mrf.mxu0
        %v1342 = vadd.f32 0.0, %v1341
        %1343 = vmatmul.f32.gmra.mxu0 %v1304
        %v1344 = vpop.f32.mrf.mxu0
        %v1345 = vadd.f32 0.0, %v1344
        %1346 = vdwg.mxu0
        %v1347 = vmul.f32 %v1336, 0.25
        %v1348 = vmul.f32 %v1339, 0.25
        %v1349 = vmul.f32 %v1342, 0.25
        %v1350 = vmul.f32 %v1345, 0.25
        %v1351 = vadd.f32 %v1347, %v690
        %v1352 = vadd.f32 %v1348, %v692
        %v1353 = vadd.f32 %v1349, %v694
        %v1354 = vadd.f32 %v1350, %v693
        %v1355 = vsel %vm703, %v1351, -inf
        %1356 = vmax.xlane.f32.xlu0 %v1355
        %v1357 = vpop.xlane.xlu0 %1356
        %v1358 = vsel %vm703, %v1352, -inf
        %1359 = vmax.xlane.f32.xlu0 %v1358
        %v1360 = vpop.xlane.xlu0 %1359
        %v1361 = vsel %vm703, %v1353, -inf
        %1362 = vmax.xlane.f32.xlu0 %v1361
        %v1363 = vpop.xlane.xlu0 %1362
        %v1364 = vsel %vm713, %v1354, -inf
        %1365 = vmax.xlane.f32.xlu0 %v1364
        %v1366 = vpop.xlane.xlu0 %1365
        %v1367 = vsub.f32 %v1351, %v1357
        %v1368 = vsub.f32 %v1352, %v1360
        %v1369 = vsub.f32 %v1353, %v1363
        %v1370 = vsub.f32 %v1354, %v1366
        %v1371 = vmul.f32 %v1367, 1.442695
        %v1372 = vpow.pop %v1371
        %v1373 = vmul.f32 %v1368, 1.442695
        %v1374 = vpow.pop %v1373
        %v1375 = vmul.f32 %v1369, 1.442695
        %v1376 = vpow.pop %v1375
        %v1377 = vmul.f32 %v1370, 1.442695
        %v1378 = vpow.pop %v1377
        %v1379 = vsel %vm703, %v1372, 0.0
        %1380 = vadd.xlane.f32.xlu0 %v1379
        %v1381 = vpop.xlane.xlu0 %1380
        %v1382 = vsel %vm703, %v1374, 0.0
        %1383 = vadd.xlane.f32.xlu0 %v1382
        %v1384 = vpop.xlane.xlu0 %1383
        %v1385 = vsel %vm703, %v1376, 0.0
        %1386 = vadd.xlane.f32.xlu0 %v1385
        %v1387 = vpop.xlane.xlu0 %1386
        %v1388 = vsel %vm713, %v1378, 0.0
        %1389 = vadd.xlane.f32.xlu0 %v1388
        %v1390 = vpop.xlane.xlu0 %1389
        %v1391 = vrcp.pop %v1381
        %v1392 = vmul.f32 %v1381, %v1391
        %v1393 = vsub.f32 1.0, %v1392
        %v1394 = vmul.f32 %v1391, %v1393
        %v1395 = vadd.f32 %v1391, %v1394
        %vm1396 = vweird.f32 %v1381
        %vm1397 = vweird.f32 %v1391
        %vm1398 = vmor %vm1396, %vm1397
        %v1399 = vsel %vm1398, %v1391, %v1395
        %v1400 = vand.u32 2147483647, %v1381
        %vm1401 = vcmp.eq.f32.partialorder %v1400, 8.507059e+37
        %v1402 = vand.u32 %v1381, 2147483648
        %v1403 = vor.u32 1.1754944e-38, %v1402
        %v1404 = vsel %vm1401, %v1403, %v1399
        %v1405 = vmul.f32 %v1372, %v1404
        %v1406 = vrcp.pop %v1384
        %v1407 = vmul.f32 %v1384, %v1406
        %v1408 = vsub.f32 1.0, %v1407
        %v1409 = vmul.f32 %v1406, %v1408
        %v1410 = vadd.f32 %v1406, %v1409
        %vm1411 = vweird.f32 %v1384
        %vm1412 = vweird.f32 %v1406
        %vm1413 = vmor %vm1411, %vm1412
        %v1414 = vsel %vm1413, %v1406, %v1410
        %v1415 = vand.u32 2147483647, %v1384
        %vm1416 = vcmp.eq.f32.partialorder %v1415, 8.507059e+37
        %v1417 = vand.u32 %v1384, 2147483648
        %v1418 = vor.u32 1.1754944e-38, %v1417
        %v1419 = vsel %vm1416, %v1418, %v1414
        %v1420 = vmul.f32 %v1374, %v1419
        %v1421 = vrcp.pop %v1387
        %v1422 = vmul.f32 %v1387, %v1421
        %v1423 = vsub.f32 1.0, %v1422
        %v1424 = vmul.f32 %v1421, %v1423
        %v1425 = vadd.f32 %v1421, %v1424
        %vm1426 = vweird.f32 %v1387
        %vm1427 = vweird.f32 %v1421
        %vm1428 = vmor %vm1426, %vm1427
        %v1429 = vsel %vm1428, %v1421, %v1425
        %v1430 = vand.u32 2147483647, %v1387
        %vm1431 = vcmp.eq.f32.partialorder %v1430, 8.507059e+37
        %v1432 = vand.u32 %v1387, 2147483648
        %v1433 = vor.u32 1.1754944e-38, %v1432
        %v1434 = vsel %vm1431, %v1433, %v1429
        %v1435 = vmul.f32 %v1376, %v1434
        %v1436 = vrcp.pop %v1390
        %v1437 = vmul.f32 %v1390, %v1436
        %v1438 = vsub.f32 1.0, %v1437
        %v1439 = vmul.f32 %v1436, %v1438
        %v1440 = vadd.f32 %v1436, %v1439
        %vm1441 = vweird.f32 %v1390
        %vm1442 = vweird.f32 %v1436
        %vm1443 = vmor %vm1441, %vm1442
        %v1444 = vsel %vm1443, %v1436, %v1440
        %v1445 = vand.u32 2147483647, %v1390
        %vm1446 = vcmp.eq.f32.partialorder %v1445, 8.507059e+37
        %v1447 = vand.u32 %v1390, 2147483648
        %v1448 = vor.u32 1.1754944e-38, %v1447
        %v1449 = vsel %vm1446, %v1448, %v1444
        %v1450 = vmul.f32 %v1378, %v1449
        %v1452 = vsel %vm703, %v1405, 0
        %v1455 = vsel %vm703, %v1420, 0
        %v1458 = vsel %vm703, %v1435, 0
        %v1461 = vsel %vm703, %v1450, 0
        %v1464 = vsel %vm687, %v1293, 0
        %1466 = vmatpush.msra.mxu0 0.0
        %1467 = vmatpush.msra.mxu0 0.0
        %1468 = vmatpush.msra.mxu0 0.0
        %1469 = vmatpush.msra.mxu0 0.0
        %1470 = vmatpush.msra.mxu0 0.0
        %1471 = vmatpush.msra.mxu0 0.0
        %1472 = vmatpush.msra.mxu0 0.0
        %1473 = vmatpush.msra.mxu0 0.0
        %1474 = vmatpush.msra.mxu0 0.0
        %1475 = vmatpush.msra.mxu0 0.0
        %1476 = vmatpush.msra.mxu0 0.0
        %1477 = vmatpush.msra.mxu0 0.0
        %1478 = vmatpush.msra.mxu0 %v1464
        %1479 = vmatpush.msra.mxu0 %v1292
        %1480 = vmatpush.msra.mxu0 %v1291
        %1481 = vmatpush.msra.mxu0 %v1290
        %1482 = vmatmul.f32.gmra.mxu0 %v1452
        %v1483 = vpop.f32.mrf.mxu0
        %v1484 = vadd.f32 0.0, %v1483
        %1485 = vmatmul.f32.gmra.mxu0 %v1455
        %v1486 = vpop.f32.mrf.mxu0
        %v1487 = vadd.f32 0.0, %v1486
        %1488 = vmatmul.f32.gmra.mxu0 %v1458
        %v1489 = vpop.f32.mrf.mxu0
        %v1490 = vadd.f32 0.0, %v1489
        %1491 = vmatmul.f32.gmra.mxu0 %v1461
        %v1492 = vpop.f32.mrf.mxu0
        %v1493 = vadd.f32 0.0, %v1492
        %1494 = vdwg.mxu0
        %1495 = vst.msk [vmem:[#allocation4] sm:$0xff] %vm625, %v1484
        %1496 = vst.msk [vmem:[#allocation4 + $0x8] sm:$0xff] %vm625, %v1487
        %1497 = vst.msk [vmem:[#allocation4 + $0x10] sm:$0xff] %vm625, %v1490
        %1498 = vst.msk [vmem:[#allocation4 + $0x18] sm:$0x1] %vm848, %v1493
        %v1499 = vld [vmem:[#allocation4] sm:$0x1f]
        %1500 = vst.msk [vmem:[#allocation5] sm:$0x1f] %vm531, %v1499
        %v1501 = vld [vmem:[#allocation4 + $0x5] sm:$0x1f]
        %1503 = vrot.lane.b32.xlu0 %v1501, 16
        %v1504 = vpop.permute.xlu0 %1503
        %1506 = vst.msk [vmem:[#allocation5] sm:$0x1f] %vm857, %v1504
        %v1507 = vld [vmem:[#allocation4 + $0xa] sm:$0x1f]
        %1509 = vrot.lane.b32.xlu0 %v1507, 32
        %v1510 = vpop.permute.xlu0 %1509
        %1512 = vst.msk [vmem:[#allocation5] sm:$0x1f] %vm864, %v1510
        %v1513 = vld [vmem:[#allocation4 + $0xf] sm:$0x1f]
        %1515 = vrot.lane.b32.xlu0 %v1513, 48
        %v1516 = vpop.permute.xlu0 %1515
        %1518 = vst.msk [vmem:[#allocation5] sm:$0x1f] %vm871, %v1516
        %v1519 = vld [vmem:[#allocation4 + $0x14] sm:$0x1f]
        %1521 = vrot.lane.b32.xlu0 %v1519, 64
        %v1522 = vpop.permute.xlu0 %1521
        %1524 = vst.msk [vmem:[#allocation5] sm:$0x1f] %vm878, %v1522
        %v1525 = vld [vmem:[#allocation5] sm:$0x1f]
        %s1526 = scalar_lea.vmem %s5, 144
        %v1527 = vld [vmem:[%s1526] sm:$0xff]
        %v1528 = vld [vmem:[%s1526 + $0x8] sm:$0xff]
        %v1529 = vld [vmem:[%s1526 + $0x10] sm:$0xff]
        %v1530 = vld [vmem:[%s1526 + $0x18] sm:$0xff]
        %v1531 = vld [vmem:[%s1526 + $0x20] sm:$0xff]
        %v1532 = vld [vmem:[%s1526 + $0x28] sm:$0xff]
        %v1533 = vld [vmem:[%s1526 + $0x30] sm:$0xff]
        %v1534 = vld [vmem:[%s1526 + $0x38] sm:$0xff]
        %v1535 = vld [vmem:[%s1526 + $0x40] sm:$0xff]
        %v1536 = vld [vmem:[%s1526 + $0x48] sm:$0xff]
        %v1537 = vld [vmem:[%s1089 + $0x4] sm:$0x1]
        %v1538 = vperm.slane %v1537, 0
        %v1540 = vsel %vm893, %v1525, 0
        %1542 = vmatpush.msra.mxu0 0.0
        %1543 = vmatpush.msra.mxu0 0.0
        %1544 = vmatpush.msra.mxu0 0.0
        %1545 = vmatpush.msra.mxu0 0.0
        %1546 = vmatpush.msra.mxu0 0.0
        %1547 = vmatpush.msra.mxu0 0.0
        %1548 = vmatpush.msra.mxu0 %v1536
        %1549 = vmatpush.msra.mxu0 %v1535
        %1550 = vmatpush.msra.mxu0 %v1534
        %1551 = vmatpush.msra.mxu0 %v1533
        %1552 = vmatpush.msra.mxu0 %v1532
        %1553 = vmatpush.msra.mxu0 %v1531
        %1554 = vmatpush.msra.mxu0 %v1530
        %1555 = vmatpush.msra.mxu0 %v1529
        %1556 = vmatpush.msra.mxu0 %v1528
        %1557 = vmatpush.msra.mxu0 %v1527
        %1558 = vmatmul.f32.gmra.mxu0 %v1540
        %v1559 = vpop.f32.mrf.mxu0
        %v1560 = vadd.f32 %v1538, %v1559
        %1561 = vdwg.mxu0
        %v1562 = vadd.f32 %v1560, %v1088
        %v1563 = vld [vmem:[%s1089 + $0x5] sm:$0x1]
        %v1564 = vld [vmem:[%s1089 + $0x6] sm:$0x1]
        %v1565 = vsel %vm377, %v1562, 0.0
        %1566 = vadd.xlane.f32.xlu0 %v1565
        %v1567 = vpop.xlane.xlu0 %1566
        %v1568 = vmul.f32 %v1567, %v387
        %v1569 = vsub.f32 %v1562, %v1568
        %v1570 = vmul.f32 %v1569, %v1569
        %v1571 = vsel %vm377, %v1570, 0.0
        %1572 = vadd.xlane.f32.xlu0 %v1571
        %v1573 = vpop.xlane.xlu0 %1572
        %v1574 = vmul.f32 %v1573, %v387
        %v1575 = vadd.f32 %v1574, 1e-05
        %v1576 = vrsqrt.pop %v1575
        %v1577 = vmul.f32 %v1576, %v1575
        %v1578 = vmul.f32 %v1577, %v1576
        %v1579 = vmul.f32 0.5, %v1578
        %v1580 = vsub.f32 1.5, %v1579
        %v1581 = vmul.f32 %v1576, %v1580
        %vm1582 = vweird.f32 %v1575
        %vm1583 = vweird.f32 %v1576
        %vm1584 = vmor %vm1582, %vm1583
        %v1585 = vsel %vm1584, %v1576, %v1581
        %v1586 = vmul.f32 %v1569, %v1585
        %v1587 = vperm.slane %v1563, 0
        %v1588 = vmul.f32 %v1586, %v1587
        %v1589 = vperm.slane %v1564, 0
        %v1590 = vadd.f32 %v1588, %v1589
        %v1591 = vld [vmem:[%s1146 + $0x8] sm:$0xff]
        %v1592 = vld [vmem:[%s1146 + $0x10] sm:$0xff]
        %v1593 = vld [vmem:[%s1146 + $0x20] sm:$0xff]
        %v1594 = vld [vmem:[%s1146 + $0x28] sm:$0xff]
        %v1595 = vld [vmem:[%s1146 + $0x38] sm:$0xff]
        %v1596 = vld [vmem:[%s1146 + $0x40] sm:$0xff]
        %v1597 = vld [vmem:[%s1146 + $0x50] sm:$0xff]
        %v1598 = vld [vmem:[%s1146 + $0x58] sm:$0xff]
        %v1599 = vld [vmem:[%s1089 + $0x8] sm:$0x1]
        %v1600 = vperm.slane %v1599, 0
        %1609 = vrot.lane.b32.xlu0 %v1591, 16
        %v1610 = vpop.permute.xlu0 %1609
        %1611 = vrot.lane.b32.xlu0 %v1592, 16
        %v1612 = vpop.permute.xlu0 %1611
        %1613 = vrot.lane.b32.xlu0 %v1593, 16
        %v1614 = vpop.permute.xlu0 %1613
        %1615 = vrot.lane.b32.xlu0 %v1594, 16
        %v1616 = vpop.permute.xlu0 %1615
        %1617 = vrot.lane.b32.xlu0 %v1595, 16
        %v1618 = vpop.permute.xlu0 %1617
        %1619 = vrot.lane.b32.xlu0 %v1596, 16
        %v1620 = vpop.permute.xlu0 %1619
        %1621 = vrot.lane.b32.xlu0 %v1597, 16
        %v1622 = vpop.permute.xlu0 %1621
        %1623 = vrot.lane.b32.xlu0 %v1598, 16
        %v1624 = vpop.permute.xlu0 %1623
        %v1625 = vsel %vm625, %v1610, %v1612
        %v1626 = vsel %vm625, %v1614, %v1616
        %v1627 = vsel %vm625, %v1618, %v1620
        %v1628 = vsel %vm625, %v1622, %v1624
        %v1634 = vsel %vm483, %v1590, 0
        %1636 = vmatpush.msra.mxu0 0.0
        %1637 = vmatpush.msra.mxu0 0.0
        %1638 = vmatpush.msra.mxu0 0.0
        %1639 = vmatpush.msra.mxu0 0.0
        %1640 = vmatpush.msra.mxu0 0.0
        %1641 = vmatpush.msra.mxu0 0.0
        %1642 = vmatpush.msra.mxu0 0.0
        %1643 = vmatpush.msra.mxu0 0.0
        %1644 = vmatpush.msra.mxu0 0.0
        %1645 = vmatpush.msra.mxu0 0.0
        %1646 = vmatpush.msra.mxu0 0.0
        %1647 = vmatpush.msra.mxu0 0.0
        %1648 = vmatpush.msra.mxu0 %v1628
        %1649 = vmatpush.msra.mxu0 %v1627
        %1650 = vmatpush.msra.mxu0 %v1626
        %1651 = vmatpush.msra.mxu0 %v1625
        %1652 = vmatmul.f32.gmra.mxu0 %v1634
        %v1653 = vpop.f32.mrf.mxu0
        %v1654 = vadd.f32 %v1600, %v1653
        %1655 = vdwg.mxu0
        %v1656 = vmul.f32 %v1654, 0.5
        %v1657 = vmul.f32 %v1654, 0.70710677
        %v1658 = vmul.f32 %v1657, %v1657
        %v1659 = vmin.f32 16.0, %v1658
        %v1660 = vmul.f32 %v1659, 2.1237322e-06
        %v1661 = vadd.f32 %v1660, 0.00028619796
        %v1662 = vmul.f32 %v1659, %v1661
        %v1663 = vadd.f32 %v1662, 0.0036580483
        %v1664 = vmul.f32 %v1659, %v1663
        %v1665 = vadd.f32 %v1664, 0.05243302
        %v1666 = vmul.f32 %v1659, %v1665
        %v1667 = vadd.f32 %v1666, 0.18741608
        %v1668 = vmul.f32 %v1659, %v1667
        %v1669 = vadd.f32 %v1668, 1.1283791
        %v1670 = vmul.f32 %v1657, %v1669
        %v1671 = vmul.f32 %v1659, 3.8918573e-05
        %v1672 = vadd.f32 %v1671, 0.001143296
        %v1673 = vmul.f32 %v1659, %v1672
        %v1674 = vadd.f32 %v1673, 0.014752088
        %v1675 = vmul.f32 %v1659, %v1674
        %v1676 = vadd.f32 %v1675, 0.112945676
        %v1677 = vmul.f32 %v1659, %v1676
        %v1678 = vadd.f32 %v1677, 0.4994258
        %v1679 = vmul.f32 %v1659, %v1678
        %v1680 = vadd.f32 %v1679, 1.0
        %v1681 = vrcp.pop %v1680
        %v1682 = vmul.f32 %v1680, %v1681
        %v1683 = vsub.f32 1.0, %v1682
        %v1684 = vmul.f32 %v1681, %v1683
        %v1685 = vadd.f32 %v1681, %v1684
        %vm1686 = vweird.f32 %v1680
        %vm1687 = vweird.f32 %v1681
        %vm1688 = vmor %vm1686, %vm1687
        %v1689 = vsel %vm1688, %v1681, %v1685
        %v1690 = vand.u32 2147483647, %v1680
        %vm1691 = vcmp.eq.f32.partialorder %v1690, 8.507059e+37
        %v1692 = vand.u32 %v1680, 2147483648
        %v1693 = vor.u32 1.1754944e-38, %v1692
        %v1694 = vsel %vm1691, %v1693, %v1689
        %v1695 = vmul.f32 %v1670, %v1694
        %v1696 = vmin.f32 %v1695, 1.0
        %v1697 = vmax.f32 %v1696, -1.0
        %v1698 = vadd.f32 %v1697, 1.0
        %v1699 = vmul.f32 %v1656, %v1698
        %v1700 = vld [vmem:[%s1526 + $0x50] sm:$0xff]
        %v1701 = vld [vmem:[%s1526 + $0x58] sm:$0xff]
        %v1702 = vld [vmem:[%s1526 + $0x60] sm:$0xff]
        %v1703 = vld [vmem:[%s1526 + $0x68] sm:$0xff]
        %v1704 = vld [vmem:[%s1526 + $0x70] sm:$0xff]
        %v1705 = vld [vmem:[%s1526 + $0x78] sm:$0xff]
        %v1706 = vld [vmem:[%s1526 + $0x80] sm:$0xff]
        %v1707 = vld [vmem:[%s1526 + $0x88] sm:$0xff]
        %v1708 = vld [vmem:[%s1089 + $0x7] sm:$0x1]
        %v1709 = vperm.slane %v1708, 0
        %v1711 = vsel %vm331, %v1699, 0
        %1713 = vmatpush.msra.mxu0 0.0
        %1714 = vmatpush.msra.mxu0 0.0
        %1715 = vmatpush.msra.mxu0 0.0
        %1716 = vmatpush.msra.mxu0 0.0
        %1717 = vmatpush.msra.mxu0 0.0
        %1718 = vmatpush.msra.mxu0 0.0
        %1719 = vmatpush.msra.mxu0 0.0
        %1720 = vmatpush.msra.mxu0 0.0
        %1721 = vmatpush.msra.mxu0 %v1707
        %1722 = vmatpush.msra.mxu0 %v1706
        %1723 = vmatpush.msra.mxu0 %v1705
        %1724 = vmatpush.msra.mxu0 %v1704
        %1725 = vmatpush.msra.mxu0 %v1703
        %1726 = vmatpush.msra.mxu0 %v1702
        %1727 = vmatpush.msra.mxu0 %v1701
        %1728 = vmatpush.msra.mxu0 %v1700
        %1729 = vmatmul.f32.gmra.mxu0 %v1711
        %v1730 = vpop.f32.mrf.mxu0
        %v1731 = vadd.f32 %v1709, %v1730
        %1732 = vdwg.mxu0
        %v1733 = vadd.f32 %v1731, %v1562
        %v1734 = vld [vmem:[%s2 + $0x5] ss:$0 sm:$0xff]
        %v1735 = vld [vmem:[%s2 + $0x6] ss:$0 sm:$0xff]
        %vm1736 = vcmask 253952
        %v1737 = vsel %vm1736, %v1733, 0.0
        %1738 = vadd.xlane.f32.xlu0 %v1737
        %v1739 = vpop.xlane.xlu0 %1738
        %v1740 = vmul.f32 %v1739, %v387
        %v1741 = vsub.f32 %v1733, %v1740
        %v1742 = vmul.f32 %v1741, %v1741
        %v1743 = vsel %vm1736, %v1742, 0.0
        %1744 = vadd.xlane.f32.xlu0 %v1743
        %v1745 = vpop.xlane.xlu0 %1744
        %v1746 = vmul.f32 %v1745, %v387
        %v1747 = vadd.f32 %v1746, 1e-05
        %v1748 = vrsqrt.pop %v1747
        %v1749 = vmul.f32 %v1748, %v1747
        %v1750 = vmul.f32 %v1749, %v1748
        %v1751 = vmul.f32 0.5, %v1750
        %v1752 = vsub.f32 1.5, %v1751
        %v1753 = vmul.f32 %v1748, %v1752
        %vm1754 = vweird.f32 %v1747
        %vm1755 = vweird.f32 %v1748
        %vm1756 = vmor %vm1754, %vm1755
        %v1757 = vsel %vm1756, %v1748, %v1753
        %v1758 = vmul.f32 %v1741, %v1757
        %v1759 = vmul.f32 %v1758, %v1734
        %v1760 = vadd.f32 %v1759, %v1735
        %v1761 = vld [vmem:[%s2 + $0x10] sm:$0xe0]
        %v1762 = vld [vmem:[%s2 + $0x20] sm:$0x7f]
        %v1763 = vld [vmem:[%s2 + $0x7] ss:$0 sm:$0xff]
        %vm1766 = vcmask 1042432
        %v1767 = vrot.slane %v1761, 5
        %v1768 = vrot.slane %v1762, 5
        %v1769 = vsel %vm1766, %v1767, %v1768
        %v1771 = vsel %vm483, %v1760, 0
        %v1773 = vsel %vm483, %v1769, 0
        %v1775 = vsel %vm483, %v1768, 0
        %1777 = vmatpush.xpose.msra.mxu0 0.0
        %1778 = vmatpush.xpose.msra.mxu0 0.0
        %1779 = vmatpush.xpose.msra.mxu0 0.0
        %1780 = vmatpush.xpose.msra.mxu0 0.0
        %1781 = vmatpush.xpose.msra.mxu0 0.0
        %1782 = vmatpush.xpose.msra.mxu0 0.0
        %1783 = vmatpush.xpose.msra.mxu0 0.0
        %1784 = vmatpush.xpose.msra.mxu0 0.0
        %1785 = vmatpush.xpose.msra.mxu0 0.0
        %1786 = vmatpush.xpose.msra.mxu0 0.0
        %1787 = vmatpush.xpose.msra.mxu0 0.0
        %1788 = vmatpush.xpose.msra.mxu0 0.0
        %1789 = vmatpush.xpose.msra.mxu0 0.0
        %1790 = vmatpush.xpose.msra.mxu0 0.0
        %1791 = vmatpush.xpose.msra.mxu0 %v1775
        %1792 = vmatpush.xpose.msra.mxu0 %v1773
        %1793 = vmatmul.f32.gmra.mxu0 %v1771
        %v1794 = vpop.f32.mrf.mxu0
        %v1795 = vadd.f32 %v1763, %v1794
        %1796 = vdwg.mxu0
        %vm1797 = vcmask 73728
        %1798 = vst.msk [vmem:[%s243] sm:$0x1] %vm1797, %v1795
        %s1799 = sand.u32 %s159, 1
        %s1800 = scalar_lea.sflag [#allocation7], %s1799
        %s1801 = sand.u32 %s159, 1
        %s1802 = scalar_lea.vmem [#allocation6], %s1801
        // Predicated region
        $region45: #{vit_forward.1} parent=43 // pred_check
          %p1803 = pneg %p169
        $region46: #{vit_forward.1} parent=43 // pred_check_branch
          %1805 = sbr.rel (%p1803) target = $region48
        $region47: #{vit_forward.1} parent=43 // pred_region
          %1807 = vsyncadd %s1800, 0
          %s1808 = scalar_lea.hbm %s6, %s20
          %s1810 = sshll.u32 %s1802, 4
          %s1811 = int_to_ptr.vmem [resolvable:$true] %s1810
          %s1812 = sshll.u32 %s1808, 4
          %s1813 = int_to_ptr.hbm [resolvable:$true] %s1812
          %1815 = dma.vmem_to_hbm [thread:$0]  %s1811, 16, %s1813, %s1800
        $region48: #{vit_forward.1} parent=43 // pred_fallthru
          _
      $region44: #{vit_forward.1} parent=5 // pred_fallthru
        _
      %p1816 = scmp.le.s32.totalorder 2, %s15
      // Predicated region
      $region49: #{vit_forward.1} parent=5 // pred_check
        %p1817 = pneg %p1816
      $region50: #{vit_forward.1} parent=5 // pred_check_branch
        %1819 = sbr.rel (%p1817) target = $region52
      $region51: #{vit_forward.1} parent=5 // pred_region
        %s1820 = ssub.s32 %s15, 2
        // Predicated region
        $region53: #{vit_forward.1} parent=51 // pred_check
          %p1821 = pneg %p175
        $region54: #{vit_forward.1} parent=51 // pred_check_branch
          %1823 = sbr.rel (%p1821) target = $region56
        $region55: #{vit_forward.1} parent=51 // pred_region
          %s1824 = sand.u32 %s160, 1
          %s1825 = scalar_lea.sflag [#allocation7], %s1824
          %s1826 = sand.u32 %s160, 1
          %s1827 = scalar_lea.vmem [#allocation6], %s1826
          %1829 = dma.done %s1825, 16
        $region56: #{vit_forward.1} parent=51 // pred_fallthru
          _
      $region52: #{vit_forward.1} parent=5 // pred_fallthru
        _
    $region6: #{vit_forward.1} parent=1 // loop_footer
      %s19 = sadd.s32 1, %s15
    $region7: #{vit_forward.1} parent=1 // loop_footer_branch
      %14 = sbr.rel target = $region3
    $region8: #{vit_forward.1} parent=1 // loop_exit
      _
    %1830 = vsyncpa [#allocation7], 1
    %s1831 = scalar_lea.sflag [#allocation7], 1
    %1832 = vsyncpa %s1831, 1

</llo_original>
